<compile_context>
chip_gen: v7x
topology: tpu7x:2x2x1
jax: 0.10.0
libtpu: 0.0.40
codegen_flags: <defaults>
</compile_context>

<pallas_src>
import functools

import jax
import jax.numpy as jnp
from jax import lax
from jax.experimental import pallas as pl
from jax.experimental.pallas import tpu as pltpu


def _round_up(x, m):
    return (x + m - 1) // m * m


def _lstm_fc_kernel(x_ref, wih_ref, whh_ref, b_ref, fcw_ref, fcb_ref,
                    out_ref, h_scr, c_scr, *, t_blk, h_pad, sigm_out):
    """Grid = (batch_tiles, time_tiles); time is the sequential axis.

    x_ref  : (t_blk*TB, C)      bf16, time-major input tile (time major, batch minor)
    wih_ref: (C, 4*h_pad)       bf16, W_ih^T (per-gate zero-padded)
    whh_ref: (h_pad, 4*h_pad)   bf16, W_hh^T (per-gate zero-padded)
    b_ref  : (1, 4*h_pad)       f32,  bias_ih + bias_hh
    fcw_ref: (h_pad, O_pad)     bf16, fc.weight^T
    fcb_ref: (1, O_pad)         f32,  fc.bias
    out_ref: (TB, O_pad)        f32
    h_scr, c_scr: (TB, h_pad)   f32 hidden / cell state (persist across time tiles)
    """
    t_idx = pl.program_id(1)

    @pl.when(t_idx == 0)
    def _():
        h_scr[...] = jnp.zeros_like(h_scr)
        c_scr[...] = jnp.zeros_like(c_scr)

    tb = h_scr.shape[0]

    # Hoisted input projection: one big matmul for the whole time tile, bias
    # folded in once (no per-step tiny matmul / broadcast on the serial chain).
    gx = jnp.dot(x_ref[...], wih_ref[...],
                 preferred_element_type=jnp.float32) + b_ref[...]   # (t_blk*TB, 4H)

    whh = whh_ref[...]
    h = h_scr[...]
    c = c_scr[...]

    # Fully unrolled recurrence; h/c live in registers, no per-step VMEM
    # round-trips. Gate slices are whole 128-lane blocks (h_pad % 128 == 0).
    for t in range(t_blk):
        gates = gx[t * tb:(t + 1) * tb, :] + jnp.dot(
            h.astype(whh.dtype), whh, preferred_element_type=jnp.float32)
        i = jax.nn.sigmoid(gates[:, 0 * h_pad:1 * h_pad])
        f = jax.nn.sigmoid(gates[:, 1 * h_pad:2 * h_pad])
        g = jnp.tanh(gates[:, 2 * h_pad:3 * h_pad])
        o = jax.nn.sigmoid(gates[:, 3 * h_pad:4 * h_pad])
        c = f * c + i * g
        h = o * jnp.tanh(c)

    h_scr[...] = h
    c_scr[...] = c

    @pl.when(t_idx == pl.num_programs(1) - 1)
    def _():
        out = jnp.dot(h.astype(fcw_ref.dtype), fcw_ref[...],
                      preferred_element_type=jnp.float32) + fcb_ref[...]
        if sigm_out:
            out = jax.nn.sigmoid(out)
        out_ref[...] = out.astype(out_ref.dtype)


def _pad_gate_dim(w, h, h_pad):
    """Pad the trailing 4*h gate axis to 4*h_pad, per gate (order i,f,g,o)."""
    lead = w.shape[:-1]
    w4 = w.reshape(lead + (4, h))
    w4 = jnp.pad(w4, [(0, 0)] * len(lead) + [(0, 0), (0, h_pad - h)])
    return w4.reshape(lead + (4 * h_pad,))


def rnn_base_forward(x, params, *, sigm_out=False):
    """x: (B, c_in, T) — same layout the PyTorch module receives."""
    B, C, T = x.shape
    wih_t = params["weight_ih_T"]          # (C, 4H)
    whh_t = params["weight_hh_T"]          # (H, 4H)
    bias = params["bias"]                  # (1, 4H)
    fcw_t = params["fc_weight_T"]          # (H, O)
    fcb = params["fc_bias"]                # (1, O)
    H = whh_t.shape[0]
    O = fcw_t.shape[1]

    # ---- lane/sublane-aligned padded sizes --------------------------------
    H_pad = _round_up(H, 128)              # gates become whole 128-lane vregs
    O_pad = _round_up(O, 128)              # lane-dense output store
    B_pad = _round_up(B, 8)
    TB = B_pad if B_pad <= 64 else 64      # batch tile ("parallel" axis)
    B_pad = _round_up(B_pad, TB)
    B_tiles = B_pad // TB

    # Time tile must divide T exactly (zero-padding time would change the LSTM).
    T_blk = next(tb for tb in (16, 8, 4, 2, 1) if T % tb == 0)
    T_tiles = T // T_blk

    # ---- pad / cast parameters (zero padding keeps padded h/c exactly 0) ---
    wih_p = _pad_gate_dim(wih_t, H, H_pad).astype(jnp.bfloat16)          # (C, 4H_pad)
    whh_p = jnp.pad(whh_t, ((0, H_pad - H), (0, 0)))
    whh_p = _pad_gate_dim(whh_p, H, H_pad).astype(jnp.bfloat16)          # (H_pad, 4H_pad)
    bias_p = _pad_gate_dim(bias, H, H_pad).astype(jnp.float32)           # (1, 4H_pad)
    fcw_p = jnp.pad(fcw_t, ((0, H_pad - H), (0, O_pad - O))).astype(jnp.bfloat16)
    fcb_p = jnp.pad(fcb, ((0, 0), (0, O_pad - O))).astype(jnp.float32)

    # x.transpose(2,1) in torch -> (B, T, C). The kernel consumes tiles shaped
    # (T_blk*TB, C) with time major / batch minor inside the tile, laid out as
    # (B_tiles, T_tiles, T_blk*TB, C) so the streamed block is a 2-D slab.
    x_tm = jnp.transpose(x, (2, 0, 1)).astype(jnp.bfloat16)              # (T, B, C)
    x_tm = jnp.pad(x_tm, ((0, 0), (0, B_pad - B), (0, 0)))               # (T, B_pad, C)
    x_tiles = x_tm.reshape(T_tiles, T_blk, B_tiles, TB, C)
    x_tiles = jnp.transpose(x_tiles, (2, 0, 1, 3, 4)).reshape(
        B_tiles, T_tiles, T_blk * TB, C)

    kernel = functools.partial(_lstm_fc_kernel, t_blk=T_blk, h_pad=H_pad,
                               sigm_out=sigm_out)

    # ---- explicit VMEM budget (double-buffered inputs + temporaries) -------
    bytes_est = (
        2 * (T_blk * TB * C * 2)                                  # x tile (bf16)
        + 2 * (C * 4 * H_pad * 2 + H_pad * 4 * H_pad * 2
               + 4 * H_pad * 4 + H_pad * O_pad * 2 + O_pad * 4)   # weights
        + 2 * (TB * O_pad * 4)                                    # output tile
        + 2 * (TB * H_pad * 4)                                    # h/c scratch
        + 2 * (T_blk * TB * 4 * H_pad * 4)                        # gx temporary
    )
    vmem_limit = int(min(max(2 * bytes_est, 4 << 20) + (2 << 20), 48 << 20))

    out_p = pl.pallas_call(
        kernel,
        out_shape=jax.ShapeDtypeStruct((B_pad, O_pad), jnp.float32),
        grid_spec=pltpu.PrefetchScalarGridSpec(
            num_scalar_prefetch=0,
            grid=(B_tiles, T_tiles),
            in_specs=[
                pl.BlockSpec((None, None, T_blk * TB, C),
                             lambda b, t: (b, t, 0, 0)),           # streamed x
                pl.BlockSpec((C, 4 * H_pad), lambda b, t: (0, 0)),     # W_ih^T
                pl.BlockSpec((H_pad, 4 * H_pad), lambda b, t: (0, 0)),  # W_hh^T
                pl.BlockSpec((1, 4 * H_pad), lambda b, t: (0, 0)),     # bias
                pl.BlockSpec((H_pad, O_pad), lambda b, t: (0, 0)),     # fc W^T
                pl.BlockSpec((1, O_pad), lambda b, t: (0, 0)),         # fc bias
            ],
            out_specs=pl.BlockSpec((TB, O_pad), lambda b, t: (b, 0)),
            scratch_shapes=[
                pltpu.VMEM((TB, H_pad), jnp.float32),   # h state
                pltpu.VMEM((TB, H_pad), jnp.float32),   # c state
            ],
        ),
        compiler_params=pltpu.CompilerParams(
            dimension_semantics=("parallel", "arbitrary"),
            vmem_limit_bytes=vmem_limit,
        ),
    )(x_tiles, wih_p, whh_p, bias_p, fcw_p, fcb_p)

    return out_p[:B, :O]


def init_params(key, c_in, c_out, hidden_size):
    """Deterministic init mirroring _RNN_Base._weights_init (LSTM cell)."""
    k1, k2, k3, k4 = jax.random.split(key, 4)
    H4 = 4 * hidden_size

    # weight_ih: xavier_normal_, shape (4H, c_in)
    std_ih = (2.0 / (c_in + H4)) ** 0.5
    w_ih = jax.random.normal(k1, (H4, c_in), jnp.float32) * std_ih

    # weight_hh: orthogonal_, shape (4H, H)  (orthonormal columns via QR)
    a = jax.random.normal(k2, (H4, hidden_size), jnp.float32)
    q, _ = jnp.linalg.qr(a)
    w_hh = q[:, :hidden_size]

    # bias_ih: zeros with forget-gate block [H:2H] set to 1; bias_hh: zeros
    b_ih = jnp.zeros((H4,), jnp.float32).at[hidden_size:2 * hidden_size].set(1.0)
    b_hh = jnp.zeros((H4,), jnp.float32)

    # fc: default nn.Linear init (uniform +/- 1/sqrt(fan_in))
    bound = 1.0 / (hidden_size ** 0.5)
    fc_w = jax.random.uniform(k3, (c_out, hidden_size), jnp.float32, -bound, bound)
    fc_b = jax.random.uniform(k4, (c_out,), jnp.float32, -bound, bound)

    return {
        "weight_ih_T": w_ih.T,                      # (C, 4H)
        "weight_hh_T": w_hh.T,                      # (H, 4H)
        "bias": (b_ih + b_hh)[None, :],             # (1, 4H)
        "fc_weight_T": fc_w.T,                      # (H, O)
        "fc_bias": fc_b[None, :],                   # (1, O)
    }


def reference_forward(x, params, *, sigm_out=False):
    """Pure-JAX reference (lax.scan LSTM), mirroring the kernel's bf16 MXU
    operands (x / weights / h cast to bf16) with f32 accumulation & gate math."""
    q = lambda a: a.astype(jnp.bfloat16).astype(jnp.float32)
    wih_t = q(params["weight_ih_T"])
    whh_t = q(params["weight_hh_T"])
    fcw_t = q(params["fc_weight_T"])
    bias = params["bias"][0]
    fcb = params["fc_bias"][0]
    H = params["weight_hh_T"].shape[0]
    x_tm = q(jnp.transpose(x, (2, 0, 1)))          # (T, B, C)
    B = x_tm.shape[1]

    def step(carry, x_t):
        h, c = carry
        gates = x_t @ wih_t + q(h) @ whh_t + bias
        i = jax.nn.sigmoid(gates[:, 0 * H:1 * H])
        f = jax.nn.sigmoid(gates[:, 1 * H:2 * H])
        g = jnp.tanh(gates[:, 2 * H:3 * H])
        o = jax.nn.sigmoid(gates[:, 3 * H:4 * H])
        c = f * c + i * g
        h = o * jnp.tanh(c)
        return (h, c), None

    (h, _), _ = lax.scan(step, (jnp.zeros((B, H)), jnp.zeros((B, H))), x_tm)
    out = q(h) @ fcw_t + fcb
    if sigm_out:
        out = jax.nn.sigmoid(out)
    return out


# TODO(synk): multi-layer (n_layers>1) and bidirectional variants of the module
# are not implemented; module defaults (single layer, unidirectional) are used.

if __name__ == "__main__":
    B, C_IN, SEQ = 8, 4, 8
    HIDDEN, C_OUT = 32, 4

    key = jax.random.PRNGKey(0)
    kx, kp = jax.random.split(key)
    x = jax.random.normal(kx, (B, C_IN, SEQ), jnp.float32)
    params = init_params(kp, C_IN, C_OUT, HIDDEN)

    out = rnn_base_forward(x, params, sigm_out=False)
    out = jax.block_until_ready(out)

    ref = reference_forward(x, params, sigm_out=False)
    assert out.shape == (B, C_OUT)
    assert jnp.max(jnp.abs(out - ref)) < 5e-3, "mismatch vs reference"

    print("KERNEL_OK")
</pallas_src>

<mosaic_0001>
module attributes {stable_mosaic.version = 11 : i64} {
  func.func @_lstm_fc_kernel(%arg0: i32, %arg1: i32, %arg2: memref<1x1x64x4xbf16, #tpu.memory_space<vmem>>, %arg3: memref<4x512xbf16, #tpu.memory_space<vmem>>, %arg4: memref<128x512xbf16, #tpu.memory_space<vmem>>, %arg5: memref<1x512xf32, #tpu.memory_space<vmem>>, %arg6: memref<128x128xbf16, #tpu.memory_space<vmem>>, %arg7: memref<1x128xf32, #tpu.memory_space<vmem>>, %arg8: memref<8x128xf32, #tpu.memory_space<vmem>>, %arg9: memref<8x128xf32, #tpu.memory_space<vmem>>, %arg10: memref<8x128xf32, #tpu.memory_space<vmem>>) attributes {dimension_semantics = [#tpu.dimension_semantics<parallel>, #tpu.dimension_semantics<arbitrary>], iteration_bounds = array<i64: 1, 1>, scalar_prefetch = 0 : i64, scratch_operands = 2 : i64, tpu.core_type = #tpu.core_type<tc>, window_params = [{transform_indices = @transform_0, window_bounds = array<i64: 1, 1, 64, 4>}, {pipeline_mode = #tpu.pipeline_mode<synchronous>, transform_indices = @transform_1, window_bounds = array<i64: 4, 512>}, {pipeline_mode = #tpu.pipeline_mode<synchronous>, transform_indices = @transform_2, window_bounds = array<i64: 128, 512>}, {pipeline_mode = #tpu.pipeline_mode<synchronous>, transform_indices = @transform_3, window_bounds = array<i64: 1, 512>}, {pipeline_mode = #tpu.pipeline_mode<synchronous>, transform_indices = @transform_4, window_bounds = array<i64: 128, 128>}, {pipeline_mode = #tpu.pipeline_mode<synchronous>, transform_indices = @transform_5, window_bounds = array<i64: 1, 128>}, {transform_indices = @transform_6, window_bounds = array<i64: 8, 128>}]} {
    %c0_i32 = arith.constant 0 : i32
    %0 = arith.cmpi eq, %arg1, %c0_i32 : i32
    %1 = arith.extui %0 : i1 to i32
    %c0_i32_0 = arith.constant 0 : i32
    %2 = arith.cmpi ne, %1, %c0_i32_0 : i32
    scf.if %2 {
      %cst_52 = arith.constant 0.000000e+00 : f32
      %250 = vector.broadcast %cst_52 : f32 to vector<8x128xf32>
      %c0_53 = arith.constant 0 : index
      %c0_54 = arith.constant 0 : index
      %251 = vector.load %arg9[%c0_53, %c0_54] : memref<8x128xf32, #tpu.memory_space<vmem>>, vector<8x128xf32>
      tpu.vector_store %arg9[%c0_53, %c0_54], %250 {strides = array<i32>} : memref<8x128xf32, #tpu.memory_space<vmem>>, vector<8x128xf32>,
      %cst_55 = arith.constant 0.000000e+00 : f32
      %252 = vector.broadcast %cst_55 : f32 to vector<8x128xf32>
      %c0_56 = arith.constant 0 : index
      %c0_57 = arith.constant 0 : index
      %253 = vector.load %arg10[%c0_56, %c0_57] : memref<8x128xf32, #tpu.memory_space<vmem>>, vector<8x128xf32>
      tpu.vector_store %arg10[%c0_56, %c0_57], %252 {strides = array<i32>} : memref<8x128xf32, #tpu.memory_space<vmem>>, vector<8x128xf32>,
    } else {
    }
    %c0 = arith.constant 0 : index
    %c0_1 = arith.constant 0 : index
    %c0_2 = arith.constant 0 : index
    %c0_3 = arith.constant 0 : index
    %3 = vector.load %arg2[%c0, %c0_1, %c0_2, %c0_3] : memref<1x1x64x4xbf16, #tpu.memory_space<vmem>>, vector<1x1x64x4xbf16>
    %4 = vector.shape_cast %3 : vector<1x1x64x4xbf16> to vector<64x4xbf16>
    %c0_4 = arith.constant 0 : index
    %c0_5 = arith.constant 0 : index
    %5 = vector.load %arg3[%c0_4, %c0_5] : memref<4x512xbf16, #tpu.memory_space<vmem>>, vector<4x512xbf16>
    %cst = arith.constant dense<0.000000e+00> : vector<64x512xf32>
    %6 = tpu.matmul %4, %5, %cst {dimension_numbers = #tpu.dot_dimension_numbers<[1], [0], [0], [1], [0, 0, 1, 1], [], []>} : vector<64x4xbf16>, vector<4x512xbf16>, vector<64x512xf32> -> vector<64x512xf32>
    %c0_6 = arith.constant 0 : index
    %c0_7 = arith.constant 0 : index
    %7 = vector.load %arg5[%c0_6, %c0_7] : memref<1x512xf32, #tpu.memory_space<vmem>>, vector<1x512xf32>
    %8 = vector.broadcast %7 : vector<1x512xf32> to vector<64x512xf32>
    %9 = arith.addf %6, %8 : vector<64x512xf32>
    %c0_8 = arith.constant 0 : index
    %c0_9 = arith.constant 0 : index
    %10 = vector.load %arg4[%c0_8, %c0_9] : memref<128x512xbf16, #tpu.memory_space<vmem>>, vector<128x512xbf16>
    %c0_10 = arith.constant 0 : index
    %c0_11 = arith.constant 0 : index
    %11 = vector.load %arg9[%c0_10, %c0_11] : memref<8x128xf32, #tpu.memory_space<vmem>>, vector<8x128xf32>
    %c0_12 = arith.constant 0 : index
    %c0_13 = arith.constant 0 : index
    %12 = vector.load %arg10[%c0_12, %c0_13] : memref<8x128xf32, #tpu.memory_space<vmem>>, vector<8x128xf32>
    %13 = vector.extract_strided_slice %9 {offsets = [0, 0], sizes = [8, 512], strides = [1, 1]} : vector<64x512xf32> to vector<8x512xf32>
    %14 = arith.truncf %11 : vector<8x128xf32> to vector<8x128xbf16>
    %cst_14 = arith.constant dense<0.000000e+00> : vector<8x512xf32>
    %15 = tpu.matmul %14, %10, %cst_14 {dimension_numbers = #tpu.dot_dimension_numbers<[1], [0], [0], [1], [0, 0, 1, 1], [], []>} : vector<8x128xbf16>, vector<128x512xbf16>, vector<8x512xf32> -> vector<8x512xf32>
    %16 = arith.addf %13, %15 : vector<8x512xf32>
    %17 = vector.extract_strided_slice %16 {offsets = [0, 0], sizes = [8, 128], strides = [1, 1]} : vector<8x512xf32> to vector<8x128xf32>
    %18 = arith.negf %17 : vector<8x128xf32>
    %19 = math.exp %18 : vector<8x128xf32>
    %cst_15 = arith.constant 1.000000e+00 : f32
    %20 = vector.broadcast %cst_15 : f32 to vector<8x128xf32>
    %21 = arith.addf %20, %19 : vector<8x128xf32>
    %22 = arith.divf %20, %21 : vector<8x128xf32>
    %23 = vector.extract_strided_slice %16 {offsets = [0, 128], sizes = [8, 128], strides = [1, 1]} : vector<8x512xf32> to vector<8x128xf32>
    %24 = arith.negf %23 : vector<8x128xf32>
    %25 = math.exp %24 : vector<8x128xf32>
    %cst_16 = arith.constant 1.000000e+00 : f32
    %26 = vector.broadcast %cst_16 : f32 to vector<8x128xf32>
    %27 = arith.addf %26, %25 : vector<8x128xf32>
    %28 = arith.divf %26, %27 : vector<8x128xf32>
    %29 = vector.extract_strided_slice %16 {offsets = [0, 256], sizes = [8, 128], strides = [1, 1]} : vector<8x512xf32> to vector<8x128xf32>
    %30 = math.tanh %29 : vector<8x128xf32>
    %31 = vector.extract_strided_slice %16 {offsets = [0, 384], sizes = [8, 128], strides = [1, 1]} : vector<8x512xf32> to vector<8x128xf32>
    %32 = arith.negf %31 : vector<8x128xf32>
    %33 = math.exp %32 : vector<8x128xf32>
    %cst_17 = arith.constant 1.000000e+00 : f32
    %34 = vector.broadcast %cst_17 : f32 to vector<8x128xf32>
    %35 = arith.addf %34, %33 : vector<8x128xf32>
    %36 = arith.divf %34, %35 : vector<8x128xf32>
    %37 = arith.mulf %28, %12 : vector<8x128xf32>
    %38 = arith.mulf %22, %30 : vector<8x128xf32>
    %39 = arith.addf %37, %38 : vector<8x128xf32>
    %40 = math.tanh %39 : vector<8x128xf32>
    %41 = arith.mulf %36, %40 : vector<8x128xf32>
    %42 = vector.extract_strided_slice %9 {offsets = [8, 0], sizes = [8, 512], strides = [1, 1]} : vector<64x512xf32> to vector<8x512xf32>
    %43 = arith.truncf %41 : vector<8x128xf32> to vector<8x128xbf16>
    %cst_18 = arith.constant dense<0.000000e+00> : vector<8x512xf32>
    %44 = tpu.matmul %43, %10, %cst_18 {dimension_numbers = #tpu.dot_dimension_numbers<[1], [0], [0], [1], [0, 0, 1, 1], [], []>} : vector<8x128xbf16>, vector<128x512xbf16>, vector<8x512xf32> -> vector<8x512xf32>
    %45 = arith.addf %42, %44 : vector<8x512xf32>
    %46 = vector.extract_strided_slice %45 {offsets = [0, 0], sizes = [8, 128], strides = [1, 1]} : vector<8x512xf32> to vector<8x128xf32>
    %47 = arith.negf %46 : vector<8x128xf32>
    %48 = math.exp %47 : vector<8x128xf32>
    %cst_19 = arith.constant 1.000000e+00 : f32
    %49 = vector.broadcast %cst_19 : f32 to vector<8x128xf32>
    %50 = arith.addf %49, %48 : vector<8x128xf32>
    %51 = arith.divf %49, %50 : vector<8x128xf32>
    %52 = vector.extract_strided_slice %45 {offsets = [0, 128], sizes = [8, 128], strides = [1, 1]} : vector<8x512xf32> to vector<8x128xf32>
    %53 = arith.negf %52 : vector<8x128xf32>
    %54 = math.exp %53 : vector<8x128xf32>
    %cst_20 = arith.constant 1.000000e+00 : f32
    %55 = vector.broadcast %cst_20 : f32 to vector<8x128xf32>
    %56 = arith.addf %55, %54 : vector<8x128xf32>
    %57 = arith.divf %55, %56 : vector<8x128xf32>
    %58 = vector.extract_strided_slice %45 {offsets = [0, 256], sizes = [8, 128], strides = [1, 1]} : vector<8x512xf32> to vector<8x128xf32>
    %59 = math.tanh %58 : vector<8x128xf32>
    %60 = vector.extract_strided_slice %45 {offsets = [0, 384], sizes = [8, 128], strides = [1, 1]} : vector<8x512xf32> to vector<8x128xf32>
    %61 = arith.negf %60 : vector<8x128xf32>
    %62 = math.exp %61 : vector<8x128xf32>
    %cst_21 = arith.constant 1.000000e+00 : f32
    %63 = vector.broadcast %cst_21 : f32 to vector<8x128xf32>
    %64 = arith.addf %63, %62 : vector<8x128xf32>
    %65 = arith.divf %63, %64 : vector<8x128xf32>
    %66 = arith.mulf %57, %39 : vector<8x128xf32>
    %67 = arith.mulf %51, %59 : vector<8x128xf32>
    %68 = arith.addf %66, %67 : vector<8x128xf32>
    %69 = math.tanh %68 : vector<8x128xf32>
    %70 = arith.mulf %65, %69 : vector<8x128xf32>
    %71 = vector.extract_strided_slice %9 {offsets = [16, 0], sizes = [8, 512], strides = [1, 1]} : vector<64x512xf32> to vector<8x512xf32>
    %72 = arith.truncf %70 : vector<8x128xf32> to vector<8x128xbf16>
    %cst_22 = arith.constant dense<0.000000e+00> : vector<8x512xf32>
    %73 = tpu.matmul %72, %10, %cst_22 {dimension_numbers = #tpu.dot_dimension_numbers<[1], [0], [0], [1], [0, 0, 1, 1], [], []>} : vector<8x128xbf16>, vector<128x512xbf16>, vector<8x512xf32> -> vector<8x512xf32>
    %74 = arith.addf %71, %73 : vector<8x512xf32>
    %75 = vector.extract_strided_slice %74 {offsets = [0, 0], sizes = [8, 128], strides = [1, 1]} : vector<8x512xf32> to vector<8x128xf32>
    %76 = arith.negf %75 : vector<8x128xf32>
    %77 = math.exp %76 : vector<8x128xf32>
    %cst_23 = arith.constant 1.000000e+00 : f32
    %78 = vector.broadcast %cst_23 : f32 to vector<8x128xf32>
    %79 = arith.addf %78, %77 : vector<8x128xf32>
    %80 = arith.divf %78, %79 : vector<8x128xf32>
    %81 = vector.extract_strided_slice %74 {offsets = [0, 128], sizes = [8, 128], strides = [1, 1]} : vector<8x512xf32> to vector<8x128xf32>
    %82 = arith.negf %81 : vector<8x128xf32>
    %83 = math.exp %82 : vector<8x128xf32>
    %cst_24 = arith.constant 1.000000e+00 : f32
    %84 = vector.broadcast %cst_24 : f32 to vector<8x128xf32>
    %85 = arith.addf %84, %83 : vector<8x128xf32>
    %86 = arith.divf %84, %85 : vector<8x128xf32>
    %87 = vector.extract_strided_slice %74 {offsets = [0, 256], sizes = [8, 128], strides = [1, 1]} : vector<8x512xf32> to vector<8x128xf32>
    %88 = math.tanh %87 : vector<8x128xf32>
    %89 = vector.extract_strided_slice %74 {offsets = [0, 384], sizes = [8, 128], strides = [1, 1]} : vector<8x512xf32> to vector<8x128xf32>
    %90 = arith.negf %89 : vector<8x128xf32>
    %91 = math.exp %90 : vector<8x128xf32>
    %cst_25 = arith.constant 1.000000e+00 : f32
    %92 = vector.broadcast %cst_25 : f32 to vector<8x128xf32>
    %93 = arith.addf %92, %91 : vector<8x128xf32>
    %94 = arith.divf %92, %93 : vector<8x128xf32>
    %95 = arith.mulf %86, %68 : vector<8x128xf32>
    %96 = arith.mulf %80, %88 : vector<8x128xf32>
    %97 = arith.addf %95, %96 : vector<8x128xf32>
    %98 = math.tanh %97 : vector<8x128xf32>
    %99 = arith.mulf %94, %98 : vector<8x128xf32>
    %100 = vector.extract_strided_slice %9 {offsets = [24, 0], sizes = [8, 512], strides = [1, 1]} : vector<64x512xf32> to vector<8x512xf32>
    %101 = arith.truncf %99 : vector<8x128xf32> to vector<8x128xbf16>
    %cst_26 = arith.constant dense<0.000000e+00> : vector<8x512xf32>
    %102 = tpu.matmul %101, %10, %cst_26 {dimension_numbers = #tpu.dot_dimension_numbers<[1], [0], [0], [1], [0, 0, 1, 1], [], []>} : vector<8x128xbf16>, vector<128x512xbf16>, vector<8x512xf32> -> vector<8x512xf32>
    %103 = arith.addf %100, %102 : vector<8x512xf32>
    %104 = vector.extract_strided_slice %103 {offsets = [0, 0], sizes = [8, 128], strides = [1, 1]} : vector<8x512xf32> to vector<8x128xf32>
    %105 = arith.negf %104 : vector<8x128xf32>
    %106 = math.exp %105 : vector<8x128xf32>
    %cst_27 = arith.constant 1.000000e+00 : f32
    %107 = vector.broadcast %cst_27 : f32 to vector<8x128xf32>
    %108 = arith.addf %107, %106 : vector<8x128xf32>
    %109 = arith.divf %107, %108 : vector<8x128xf32>
    %110 = vector.extract_strided_slice %103 {offsets = [0, 128], sizes = [8, 128], strides = [1, 1]} : vector<8x512xf32> to vector<8x128xf32>
    %111 = arith.negf %110 : vector<8x128xf32>
    %112 = math.exp %111 : vector<8x128xf32>
    %cst_28 = arith.constant 1.000000e+00 : f32
    %113 = vector.broadcast %cst_28 : f32 to vector<8x128xf32>
    %114 = arith.addf %113, %112 : vector<8x128xf32>
    %115 = arith.divf %113, %114 : vector<8x128xf32>
    %116 = vector.extract_strided_slice %103 {offsets = [0, 256], sizes = [8, 128], strides = [1, 1]} : vector<8x512xf32> to vector<8x128xf32>
    %117 = math.tanh %116 : vector<8x128xf32>
    %118 = vector.extract_strided_slice %103 {offsets = [0, 384], sizes = [8, 128], strides = [1, 1]} : vector<8x512xf32> to vector<8x128xf32>
    %119 = arith.negf %118 : vector<8x128xf32>
    %120 = math.exp %119 : vector<8x128xf32>
    %cst_29 = arith.constant 1.000000e+00 : f32
    %121 = vector.broadcast %cst_29 : f32 to vector<8x128xf32>
    %122 = arith.addf %121, %120 : vector<8x128xf32>
    %123 = arith.divf %121, %122 : vector<8x128xf32>
    %124 = arith.mulf %115, %97 : vector<8x128xf32>
    %125 = arith.mulf %109, %117 : vector<8x128xf32>
    %126 = arith.addf %124, %125 : vector<8x128xf32>
    %127 = math.tanh %126 : vector<8x128xf32>
    %128 = arith.mulf %123, %127 : vector<8x128xf32>
    %129 = vector.extract_strided_slice %9 {offsets = [32, 0], sizes = [8, 512], strides = [1, 1]} : vector<64x512xf32> to vector<8x512xf32>
    %130 = arith.truncf %128 : vector<8x128xf32> to vector<8x128xbf16>
    %cst_30 = arith.constant dense<0.000000e+00> : vector<8x512xf32>
    %131 = tpu.matmul %130, %10, %cst_30 {dimension_numbers = #tpu.dot_dimension_numbers<[1], [0], [0], [1], [0, 0, 1, 1], [], []>} : vector<8x128xbf16>, vector<128x512xbf16>, vector<8x512xf32> -> vector<8x512xf32>
    %132 = arith.addf %129, %131 : vector<8x512xf32>
    %133 = vector.extract_strided_slice %132 {offsets = [0, 0], sizes = [8, 128], strides = [1, 1]} : vector<8x512xf32> to vector<8x128xf32>
    %134 = arith.negf %133 : vector<8x128xf32>
    %135 = math.exp %134 : vector<8x128xf32>
    %cst_31 = arith.constant 1.000000e+00 : f32
    %136 = vector.broadcast %cst_31 : f32 to vector<8x128xf32>
    %137 = arith.addf %136, %135 : vector<8x128xf32>
    %138 = arith.divf %136, %137 : vector<8x128xf32>
    %139 = vector.extract_strided_slice %132 {offsets = [0, 128], sizes = [8, 128], strides = [1, 1]} : vector<8x512xf32> to vector<8x128xf32>
    %140 = arith.negf %139 : vector<8x128xf32>
    %141 = math.exp %140 : vector<8x128xf32>
    %cst_32 = arith.constant 1.000000e+00 : f32
    %142 = vector.broadcast %cst_32 : f32 to vector<8x128xf32>
    %143 = arith.addf %142, %141 : vector<8x128xf32>
    %144 = arith.divf %142, %143 : vector<8x128xf32>
    %145 = vector.extract_strided_slice %132 {offsets = [0, 256], sizes = [8, 128], strides = [1, 1]} : vector<8x512xf32> to vector<8x128xf32>
    %146 = math.tanh %145 : vector<8x128xf32>
    %147 = vector.extract_strided_slice %132 {offsets = [0, 384], sizes = [8, 128], strides = [1, 1]} : vector<8x512xf32> to vector<8x128xf32>
    %148 = arith.negf %147 : vector<8x128xf32>
    %149 = math.exp %148 : vector<8x128xf32>
    %cst_33 = arith.constant 1.000000e+00 : f32
    %150 = vector.broadcast %cst_33 : f32 to vector<8x128xf32>
    %151 = arith.addf %150, %149 : vector<8x128xf32>
    %152 = arith.divf %150, %151 : vector<8x128xf32>
    %153 = arith.mulf %144, %126 : vector<8x128xf32>
    %154 = arith.mulf %138, %146 : vector<8x128xf32>
    %155 = arith.addf %153, %154 : vector<8x128xf32>
    %156 = math.tanh %155 : vector<8x128xf32>
    %157 = arith.mulf %152, %156 : vector<8x128xf32>
    %158 = vector.extract_strided_slice %9 {offsets = [40, 0], sizes = [8, 512], strides = [1, 1]} : vector<64x512xf32> to vector<8x512xf32>
    %159 = arith.truncf %157 : vector<8x128xf32> to vector<8x128xbf16>
    %cst_34 = arith.constant dense<0.000000e+00> : vector<8x512xf32>
    %160 = tpu.matmul %159, %10, %cst_34 {dimension_numbers = #tpu.dot_dimension_numbers<[1], [0], [0], [1], [0, 0, 1, 1], [], []>} : vector<8x128xbf16>, vector<128x512xbf16>, vector<8x512xf32> -> vector<8x512xf32>
    %161 = arith.addf %158, %160 : vector<8x512xf32>
    %162 = vector.extract_strided_slice %161 {offsets = [0, 0], sizes = [8, 128], strides = [1, 1]} : vector<8x512xf32> to vector<8x128xf32>
    %163 = arith.negf %162 : vector<8x128xf32>
    %164 = math.exp %163 : vector<8x128xf32>
    %cst_35 = arith.constant 1.000000e+00 : f32
    %165 = vector.broadcast %cst_35 : f32 to vector<8x128xf32>
    %166 = arith.addf %165, %164 : vector<8x128xf32>
    %167 = arith.divf %165, %166 : vector<8x128xf32>
    %168 = vector.extract_strided_slice %161 {offsets = [0, 128], sizes = [8, 128], strides = [1, 1]} : vector<8x512xf32> to vector<8x128xf32>
    %169 = arith.negf %168 : vector<8x128xf32>
    %170 = math.exp %169 : vector<8x128xf32>
    %cst_36 = arith.constant 1.000000e+00 : f32
    %171 = vector.broadcast %cst_36 : f32 to vector<8x128xf32>
    %172 = arith.addf %171, %170 : vector<8x128xf32>
    %173 = arith.divf %171, %172 : vector<8x128xf32>
    %174 = vector.extract_strided_slice %161 {offsets = [0, 256], sizes = [8, 128], strides = [1, 1]} : vector<8x512xf32> to vector<8x128xf32>
    %175 = math.tanh %174 : vector<8x128xf32>
    %176 = vector.extract_strided_slice %161 {offsets = [0, 384], sizes = [8, 128], strides = [1, 1]} : vector<8x512xf32> to vector<8x128xf32>
    %177 = arith.negf %176 : vector<8x128xf32>
    %178 = math.exp %177 : vector<8x128xf32>
    %cst_37 = arith.constant 1.000000e+00 : f32
    %179 = vector.broadcast %cst_37 : f32 to vector<8x128xf32>
    %180 = arith.addf %179, %178 : vector<8x128xf32>
    %181 = arith.divf %179, %180 : vector<8x128xf32>
    %182 = arith.mulf %173, %155 : vector<8x128xf32>
    %183 = arith.mulf %167, %175 : vector<8x128xf32>
    %184 = arith.addf %182, %183 : vector<8x128xf32>
    %185 = math.tanh %184 : vector<8x128xf32>
    %186 = arith.mulf %181, %185 : vector<8x128xf32>
    %187 = vector.extract_strided_slice %9 {offsets = [48, 0], sizes = [8, 512], strides = [1, 1]} : vector<64x512xf32> to vector<8x512xf32>
    %188 = arith.truncf %186 : vector<8x128xf32> to vector<8x128xbf16>
    %cst_38 = arith.constant dense<0.000000e+00> : vector<8x512xf32>
    %189 = tpu.matmul %188, %10, %cst_38 {dimension_numbers = #tpu.dot_dimension_numbers<[1], [0], [0], [1], [0, 0, 1, 1], [], []>} : vector<8x128xbf16>, vector<128x512xbf16>, vector<8x512xf32> -> vector<8x512xf32>
    %190 = arith.addf %187, %189 : vector<8x512xf32>
    %191 = vector.extract_strided_slice %190 {offsets = [0, 0], sizes = [8, 128], strides = [1, 1]} : vector<8x512xf32> to vector<8x128xf32>
    %192 = arith.negf %191 : vector<8x128xf32>
    %193 = math.exp %192 : vector<8x128xf32>
    %cst_39 = arith.constant 1.000000e+00 : f32
    %194 = vector.broadcast %cst_39 : f32 to vector<8x128xf32>
    %195 = arith.addf %194, %193 : vector<8x128xf32>
    %196 = arith.divf %194, %195 : vector<8x128xf32>
    %197 = vector.extract_strided_slice %190 {offsets = [0, 128], sizes = [8, 128], strides = [1, 1]} : vector<8x512xf32> to vector<8x128xf32>
    %198 = arith.negf %197 : vector<8x128xf32>
    %199 = math.exp %198 : vector<8x128xf32>
    %cst_40 = arith.constant 1.000000e+00 : f32
    %200 = vector.broadcast %cst_40 : f32 to vector<8x128xf32>
    %201 = arith.addf %200, %199 : vector<8x128xf32>
    %202 = arith.divf %200, %201 : vector<8x128xf32>
    %203 = vector.extract_strided_slice %190 {offsets = [0, 256], sizes = [8, 128], strides = [1, 1]} : vector<8x512xf32> to vector<8x128xf32>
    %204 = math.tanh %203 : vector<8x128xf32>
    %205 = vector.extract_strided_slice %190 {offsets = [0, 384], sizes = [8, 128], strides = [1, 1]} : vector<8x512xf32> to vector<8x128xf32>
    %206 = arith.negf %205 : vector<8x128xf32>
    %207 = math.exp %206 : vector<8x128xf32>
    %cst_41 = arith.constant 1.000000e+00 : f32
    %208 = vector.broadcast %cst_41 : f32 to vector<8x128xf32>
    %209 = arith.addf %208, %207 : vector<8x128xf32>
    %210 = arith.divf %208, %209 : vector<8x128xf32>
    %211 = arith.mulf %202, %184 : vector<8x128xf32>
    %212 = arith.mulf %196, %204 : vector<8x128xf32>
    %213 = arith.addf %211, %212 : vector<8x128xf32>
    %214 = math.tanh %213 : vector<8x128xf32>
    %215 = arith.mulf %210, %214 : vector<8x128xf32>
    %216 = vector.extract_strided_slice %9 {offsets = [56, 0], sizes = [8, 512], strides = [1, 1]} : vector<64x512xf32> to vector<8x512xf32>
    %217 = arith.truncf %215 : vector<8x128xf32> to vector<8x128xbf16>
    %cst_42 = arith.constant dense<0.000000e+00> : vector<8x512xf32>
    %218 = tpu.matmul %217, %10, %cst_42 {dimension_numbers = #tpu.dot_dimension_numbers<[1], [0], [0], [1], [0, 0, 1, 1], [], []>} : vector<8x128xbf16>, vector<128x512xbf16>, vector<8x512xf32> -> vector<8x512xf32>
    %219 = arith.addf %216, %218 : vector<8x512xf32>
    %220 = vector.extract_strided_slice %219 {offsets = [0, 0], sizes = [8, 128], strides = [1, 1]} : vector<8x512xf32> to vector<8x128xf32>
    %221 = arith.negf %220 : vector<8x128xf32>
    %222 = math.exp %221 : vector<8x128xf32>
    %cst_43 = arith.constant 1.000000e+00 : f32
    %223 = vector.broadcast %cst_43 : f32 to vector<8x128xf32>
    %224 = arith.addf %223, %222 : vector<8x128xf32>
    %225 = arith.divf %223, %224 : vector<8x128xf32>
    %226 = vector.extract_strided_slice %219 {offsets = [0, 128], sizes = [8, 128], strides = [1, 1]} : vector<8x512xf32> to vector<8x128xf32>
    %227 = arith.negf %226 : vector<8x128xf32>
    %228 = math.exp %227 : vector<8x128xf32>
    %cst_44 = arith.constant 1.000000e+00 : f32
    %229 = vector.broadcast %cst_44 : f32 to vector<8x128xf32>
    %230 = arith.addf %229, %228 : vector<8x128xf32>
    %231 = arith.divf %229, %230 : vector<8x128xf32>
    %232 = vector.extract_strided_slice %219 {offsets = [0, 256], sizes = [8, 128], strides = [1, 1]} : vector<8x512xf32> to vector<8x128xf32>
    %233 = math.tanh %232 : vector<8x128xf32>
    %234 = vector.extract_strided_slice %219 {offsets = [0, 384], sizes = [8, 128], strides = [1, 1]} : vector<8x512xf32> to vector<8x128xf32>
    %235 = arith.negf %234 : vector<8x128xf32>
    %236 = math.exp %235 : vector<8x128xf32>
    %cst_45 = arith.constant 1.000000e+00 : f32
    %237 = vector.broadcast %cst_45 : f32 to vector<8x128xf32>
    %238 = arith.addf %237, %236 : vector<8x128xf32>
    %239 = arith.divf %237, %238 : vector<8x128xf32>
    %240 = arith.mulf %231, %213 : vector<8x128xf32>
    %241 = arith.mulf %225, %233 : vector<8x128xf32>
    %242 = arith.addf %240, %241 : vector<8x128xf32>
    %243 = math.tanh %242 : vector<8x128xf32>
    %244 = arith.mulf %239, %243 : vector<8x128xf32>
    %c0_46 = arith.constant 0 : index
    %c0_47 = arith.constant 0 : index
    %245 = vector.load %arg9[%c0_46, %c0_47] : memref<8x128xf32, #tpu.memory_space<vmem>>, vector<8x128xf32>
    tpu.vector_store %arg9[%c0_46, %c0_47], %244 {strides = array<i32>} : memref<8x128xf32, #tpu.memory_space<vmem>>, vector<8x128xf32>,
    %c0_48 = arith.constant 0 : index
    %c0_49 = arith.constant 0 : index
    %246 = vector.load %arg10[%c0_48, %c0_49] : memref<8x128xf32, #tpu.memory_space<vmem>>, vector<8x128xf32>
    tpu.vector_store %arg10[%c0_48, %c0_49], %242 {strides = array<i32>} : memref<8x128xf32, #tpu.memory_space<vmem>>, vector<8x128xf32>,
    %c0_i32_50 = arith.constant 0 : i32
    %247 = arith.cmpi eq, %arg1, %c0_i32_50 : i32
    %248 = arith.extui %247 : i1 to i32
    %c0_i32_51 = arith.constant 0 : i32
    %249 = arith.cmpi ne, %248, %c0_i32_51 : i32
    scf.if %249 {
      %250 = arith.truncf %244 : vector<8x128xf32> to vector<8x128xbf16>
      %c0_52 = arith.constant 0 : index
      %c0_53 = arith.constant 0 : index
      %251 = vector.load %arg6[%c0_52, %c0_53] : memref<128x128xbf16, #tpu.memory_space<vmem>>, vector<128x128xbf16>
      %cst_54 = arith.constant dense<0.000000e+00> : vector<8x128xf32>
      %252 = tpu.matmul %250, %251, %cst_54 {dimension_numbers = #tpu.dot_dimension_numbers<[1], [0], [0], [1], [0, 0, 1, 1], [], []>} : vector<8x128xbf16>, vector<128x128xbf16>, vector<8x128xf32> -> vector<8x128xf32>
      %c0_55 = arith.constant 0 : index
      %c0_56 = arith.constant 0 : index
      %253 = vector.load %arg7[%c0_55, %c0_56] : memref<1x128xf32, #tpu.memory_space<vmem>>, vector<1x128xf32>
      %254 = vector.broadcast %253 : vector<1x128xf32> to vector<8x128xf32>
      %255 = arith.addf %252, %254 : vector<8x128xf32>
      %c0_57 = arith.constant 0 : index
      %c0_58 = arith.constant 0 : index
      %256 = vector.load %arg8[%c0_57, %c0_58] : memref<8x128xf32, #tpu.memory_space<vmem>>, vector<8x128xf32>
      tpu.vector_store %arg8[%c0_57, %c0_58], %255 {strides = array<i32>} : memref<8x128xf32, #tpu.memory_space<vmem>>, vector<8x128xf32>,
    } else {
    }
    return
  }
  func.func @transform_0(%arg0: i32, %arg1: i32) -> (i32, i32, i32, i32) {
    %c0_i32 = arith.constant 0 : i32
    %c0_i32_0 = arith.constant 0 : i32
    %c0_i32_1 = arith.constant 0 : i32
    return %arg0, %arg1, %c0_i32, %c0_i32_0 : i32, i32, i32, i32
  }
  func.func @transform_1(%arg0: i32, %arg1: i32) -> (i32, i32) {
    %c0_i32 = arith.constant 0 : i32
    %c0_i32_0 = arith.constant 0 : i32
    %c0_i32_1 = arith.constant 0 : i32
    return %c0_i32, %c0_i32_0 : i32, i32
  }
  func.func @transform_2(%arg0: i32, %arg1: i32) -> (i32, i32) {
    %c0_i32 = arith.constant 0 : i32
    %c0_i32_0 = arith.constant 0 : i32
    %c0_i32_1 = arith.constant 0 : i32
    return %c0_i32, %c0_i32_0 : i32, i32
  }
  func.func @transform_3(%arg0: i32, %arg1: i32) -> (i32, i32) {
    %c0_i32 = arith.constant 0 : i32
    %c0_i32_0 = arith.constant 0 : i32
    %c0_i32_1 = arith.constant 0 : i32
    return %c0_i32, %c0_i32_0 : i32, i32
  }
  func.func @transform_4(%arg0: i32, %arg1: i32) -> (i32, i32) {
    %c0_i32 = arith.constant 0 : i32
    %c0_i32_0 = arith.constant 0 : i32
    %c0_i32_1 = arith.constant 0 : i32
    return %c0_i32, %c0_i32_0 : i32, i32
  }
  func.func @transform_5(%arg0: i32, %arg1: i32) -> (i32, i32) {
    %c0_i32 = arith.constant 0 : i32
    %c0_i32_0 = arith.constant 0 : i32
    %c0_i32_1 = arith.constant 0 : i32
    return %c0_i32, %c0_i32_0 : i32, i32
  }
  func.func @transform_6(%arg0: i32, %arg1: i32) -> (i32, i32) {
    %c0_i32 = arith.constant 0 : i32
    %c0_i32_0 = arith.constant 0 : i32
    return %arg0, %c0_i32 : i32, i32
  }
}

</mosaic_0001>

<llo_original>
// kernel: tpu_custom_call.1
$region0: #{tpu_custom_call.1}
  #allocation0 [shape = 'u32[]', space=smem, size = 0x4, offset = 0x4, fixed_abs, tag = 'smem constant byte address 0x4 - core index']
  #allocation1 [shape = 'u32[144,128]{1,0:T(1,128)}', space=vmem, size = 0x12000, scoped, tag = 'internal scratch']
  #allocation2 [shape = 'f32[8,128]{1,0:T(8,128)}', space=vmem, size = 0x1000, scoped, tag = 'scratch operand']
  #allocation3 [shape = 'f32[8,128]{1,0:T(8,128)}', space=vmem, size = 0x1000, scoped, tag = 'scratch operand']
  %s0 = inlined_call_operand.vmem [shape: bf16[1,1,64,4], index: 0, kind: input, shape index: {}]
  %s1 = inlined_call_operand.vmem [shape: bf16[4,512], index: 1, kind: input, shape index: {}]
  %s2 = inlined_call_operand.hbm [shape: bf16[128,512], index: 2, kind: input, shape index: {}]
  %s3 = inlined_call_operand.vmem [shape: f32[1,512], index: 3, kind: input, shape index: {}]
  %s4 = inlined_call_operand.hbm [shape: bf16[128,128], index: 4, kind: input, shape index: {}]
  %s5 = inlined_call_operand.vmem [shape: f32[1,128], index: 5, kind: input, shape index: {}]
  %s6 = inlined_call_operand.hbm [shape: f32[8,128], index: 6, kind: output, shape index: {}]
  %s7 = sld [smem:[#allocation0]]
  $region50: #{tpu_custom_call.1} parent=0
    _
  %s9 = ssub.s32 1, %s7
  %s10 = scalar_select 0, %s9, %s7
  $region1: #{tpu_custom_call.1} parent=0
    #allocation4 [shape = 'u8[131072]{0}', space=vmem, size = 0x20000, scoped, tag = 'input window, operand 2, single buffered']
    #allocation5 [shape = 's32[1]{0}', space=sflag, size = 0x4, scoped, tag = 'scoped memory for tpu_custom_call.1']
    #allocation6 [shape = 's32[1]{0}', space=sflag, size = 0x4, scoped, tag = 'scoped memory for tpu_custom_call.1']
    #allocation7 [shape = 'u8[32768]{0}', space=vmem, size = 0x8000, scoped, tag = 'input window, operand 4, single buffered']
    #allocation8 [shape = 's32[1]{0}', space=sflag, size = 0x4, scoped, tag = 'scoped memory for tpu_custom_call.1']
    #allocation9 [shape = 'u8[4096]{0}', space=vmem, size = 0x1000, scoped, tag = 'output window, operand 0, single buffered']
    %11 = vsyncpa [#allocation5], 0
    %12 = vsyncpa [#allocation8], 0
    %13 = vsyncpa [#allocation6], 0
    // Predicated region
    $region2: #{tpu_custom_call.1} parent=1 // pred_check
      _
    $region3: #{tpu_custom_call.1} parent=1 // pred_check_branch
      %15 = sbr.rel (0) target = $region5
    $region4: #{tpu_custom_call.1} parent=1 // pred_region
      _
    $region5: #{tpu_custom_call.1} parent=1 // pred_fallthru
      _
    // Predicated region
    $region6: #{tpu_custom_call.1} parent=1 // pred_check
      _
    $region7: #{tpu_custom_call.1} parent=1 // pred_check_branch
      %17 = sbr.rel (0) target = $region9
    $region8: #{tpu_custom_call.1} parent=1 // pred_region
      _
    $region9: #{tpu_custom_call.1} parent=1 // pred_fallthru
      _
    // Predicated region
    $region10: #{tpu_custom_call.1} parent=1 // pred_check
      _
    $region11: #{tpu_custom_call.1} parent=1 // pred_check_branch
      %19 = sbr.rel (0) target = $region13
    $region12: #{tpu_custom_call.1} parent=1 // pred_region
      %s21 = ssub.s32 4096, 4096
      %22 = vsyncadd [#allocation5], %s21
      %s23 = sshll.u32 [#allocation4], 4
      %s24 = int_to_ptr.vmem [resolvable:$true] %s23
      %29 = dma.hbm_to_vmem [thread:$0]  %s2, 4096, %s24, [#allocation5], 256, 256, 16
    $region13: #{tpu_custom_call.1} parent=1 // pred_fallthru
      _
    // Predicated region
    $region14: #{tpu_custom_call.1} parent=1 // pred_check
      _
    $region15: #{tpu_custom_call.1} parent=1 // pred_check_branch
      %31 = sbr.rel (0) target = $region17
    $region16: #{tpu_custom_call.1} parent=1 // pred_region
      _
    $region17: #{tpu_custom_call.1} parent=1 // pred_fallthru
      _
    // Predicated region
    $region18: #{tpu_custom_call.1} parent=1 // pred_check
      _
    $region19: #{tpu_custom_call.1} parent=1 // pred_check_branch
      %33 = sbr.rel (0) target = $region21
    $region20: #{tpu_custom_call.1} parent=1 // pred_region
      %s35 = ssub.s32 1024, 1024
      %36 = vsyncadd [#allocation8], %s35
      %s37 = sshll.u32 [#allocation7], 4
      %s38 = int_to_ptr.vmem [resolvable:$true] %s37
      %43 = dma.hbm_to_vmem [thread:$0]  %s4, 1024, %s38, [#allocation8], 64, 64, 4
    $region21: #{tpu_custom_call.1} parent=1 // pred_fallthru
      _
    // Predicated region
    $region22: #{tpu_custom_call.1} parent=1 // pred_check
      _
    $region23: #{tpu_custom_call.1} parent=1 // pred_check_branch
      %45 = sbr.rel (0) target = $region25
    $region24: #{tpu_custom_call.1} parent=1 // pred_region
      _
    $region25: #{tpu_custom_call.1} parent=1 // pred_fallthru
      _
    // Predicated region
    $region26: #{tpu_custom_call.1} parent=1 // pred_check
      _
    $region27: #{tpu_custom_call.1} parent=1 // pred_check_branch
      %47 = sbr.rel (0) target = $region29
    $region28: #{tpu_custom_call.1} parent=1 // pred_region
      %48 = dma.done [#allocation5], 4096
    $region29: #{tpu_custom_call.1} parent=1 // pred_fallthru
      _
    // Predicated region
    $region30: #{tpu_custom_call.1} parent=1 // pred_check
      _
    $region31: #{tpu_custom_call.1} parent=1 // pred_check_branch
      %50 = sbr.rel (0) target = $region33
    $region32: #{tpu_custom_call.1} parent=1 // pred_region
      %51 = dma.done [#allocation8], 1024
    $region33: #{tpu_custom_call.1} parent=1 // pred_fallthru
      _
    %p53 = scmp.eq.s32.totalorder 0, 0
    // Predicated region
    $region34: #{tpu_custom_call.1} parent=1 // pred_check
      %p54 = pneg %p53
    $region35: #{tpu_custom_call.1} parent=1 // pred_check_branch
      %56 = sbr.rel (%p54) target = $region37
    $region36: #{tpu_custom_call.1} parent=1 // pred_region
      %57 = vst [vmem:[#allocation2] sm:$0xff] 0.0
      %58 = vst [vmem:[#allocation3] sm:$0xff] 0.0
    $region37: #{tpu_custom_call.1} parent=1 // pred_fallthru
      _
    %v59 = vld [vmem:[%s0] sm:$0xf]
    %v60 = vld [vmem:[%s0 + $0x4] sm:$0xf]
    %v61 = vld [vmem:[%s0 + $0x8] sm:$0xf]
    %v62 = vld [vmem:[%s0 + $0xc] sm:$0xf]
    %v63 = vld [vmem:[%s0 + $0x10] sm:$0xf]
    %v64 = vld [vmem:[%s0 + $0x14] sm:$0xf]
    %v65 = vld [vmem:[%s0 + $0x18] sm:$0xf]
    %v66 = vld [vmem:[%s0 + $0x1c] sm:$0xf]
    %v67 = vld [vmem:[%s1] sm:$0xff]
    %v68 = vld [vmem:[%s3] sm:$0xf]
    %v70 = vlaneseq
    %v71 = vshrl.u32 %v70, 7
    %v72 = vsub.s32 0, %v71
    %v73 = vrot.slane %v68, %v72
    %v74 = vlaneseq
    %v75 = vshrl.u32 %v74, 7
    %v76 = vsub.s32 1, %v75
    %v77 = vrot.slane %v68, %v76
    %v78 = vlaneseq
    %v79 = vshrl.u32 %v78, 7
    %v80 = vsub.s32 2, %v79
    %v81 = vrot.slane %v68, %v80
    %v82 = vlaneseq
    %v83 = vshrl.u32 %v82, 7
    %v84 = vsub.s32 3, %v83
    %v85 = vrot.slane %v68, %v84
    %v98 = vunpack.c.l.b16 %v59
    %v99 = vunpack.c.l.b16 %v60
    %v100 = vunpack.c.l.b16 %v61
    %v101 = vunpack.c.l.b16 %v62
    %v102 = vunpack.c.l.b16 %v63
    %v103 = vunpack.c.l.b16 %v64
    %v104 = vunpack.c.l.b16 %v65
    %v105 = vunpack.c.l.b16 %v66
    %v106 = vpack.c.b16 %v99, %v98
    %v107 = vpack.c.b16 %v101, %v100
    %v108 = vpack.c.b16 %v103, %v102
    %v109 = vpack.c.b16 %v105, %v104
    %v111 = vcombine.high %v67, %v67
    %v113 = vunpack.c.l.s4 1983009808
    %v114 = vunpack.c.0.s8 %v113
    %v115 = vlaneseq
    %v116 = vshrl.u32 %v115, 7
    %v117 = vsub.s32 %v114, %v116
    %v118 = vrot.slane %v67, %v117
    %v120 = vunpack.c.l.s4 1983009808
    %v121 = vunpack.c.0.s8 %v120
    %v122 = vlaneseq
    %v123 = vshrl.u32 %v122, 7
    %v124 = vsub.s32 %v121, %v123
    %v125 = vrot.slane %v111, %v124
    %v126 = vcombine.high %v118, %v118
    %v127 = vcombine.high %v125, %v125
    %vm128 = vcmask 31744
    %v130 = vsel %vm128, %v106, 0
    %v133 = vsel %vm128, %v107, 0
    %v136 = vsel %vm128, %v108, 0
    %v139 = vsel %vm128, %v109, 0
    %vm141 = vcmask 1041408
    %v143 = vsel %vm141, %v118, 0
    %v146 = vsel %vm141, %v126, 0
    %v149 = vsel %vm141, %v125, 0
    %v152 = vsel %vm141, %v127, 0
    %154 = vmatprep.subr.bf16.mxu0 %v146
    %155 = vmatpush1.bf16.msra.mxu0 %v143
    %156 = vmatprep.subr.bf16.mxu0 0
    %157 = vmatpush1.bf16.msra.mxu0 0
    %158 = vmatprep.subr.bf16.mxu0 0
    %159 = vmatpush1.bf16.msra.mxu0 0
    %160 = vmatprep.subr.bf16.mxu0 0
    %161 = vmatpush1.bf16.msra.mxu0 0
    %162 = vmatprep.subr.bf16.mxu0 0
    %163 = vmatpush1.bf16.msra.mxu0 0
    %164 = vmatprep.subr.bf16.mxu0 0
    %165 = vmatpush1.bf16.msra.mxu0 0
    %166 = vmatprep.subr.bf16.mxu0 0
    %167 = vmatpush1.bf16.msra.mxu0 0
    %168 = vmatprep.subr.bf16.mxu0 0
    %169 = vmatpush1.bf16.msra.mxu0 0
    %170 = vmatprep.subr.bf16.mxu0 0
    %171 = vmatpush1.bf16.msra.mxu0 0
    %172 = vmatprep.subr.bf16.mxu0 0
    %173 = vmatpush1.bf16.msra.mxu0 0
    %174 = vmatprep.subr.bf16.mxu0 0
    %175 = vmatpush1.bf16.msra.mxu0 0
    %176 = vmatprep.subr.bf16.mxu0 0
    %177 = vmatpush1.bf16.msra.mxu0 0
    %178 = vmatprep.subr.bf16.mxu0 0
    %179 = vmatpush1.bf16.msra.mxu0 0
    %180 = vmatprep.subr.bf16.mxu0 0
    %181 = vmatpush1.bf16.msra.mxu0 0
    %182 = vmatprep.subr.bf16.mxu0 0
    %183 = vmatpush1.bf16.msra.mxu0 0
    %184 = vmatprep.subr.bf16.mxu0 0
    %185 = vmatpush1.bf16.msra.mxu0 0
    %186 = vmatprep.mubr.bf16.mxu0 0
    %187 = vmatmul.mubr.bf16.gmra.mrb[0].mxu0 %v130
    %v188 = vpop.f32.mrb[0].mxu0
    %v189 = vadd.f32 %v73, %v188
    %v190 = vpop.f32.mrb[0].mxu0
    %v191 = vadd.f32 %v77, %v190
    %v192 = vpop.f32.mrb[0].mxu0
    %v193 = vadd.f32 %v73, %v192
    %v194 = vpop.f32.mrb[0].mxu0
    %v195 = vadd.f32 %v77, %v194
    %196 = vmatprep.mubr.bf16.mxu0 0
    %197 = vmatmul.mubr.bf16.gmra.mrb[0].mxu0 %v133
    %v198 = vpop.f32.mrb[0].mxu0
    %v199 = vadd.f32 %v73, %v198
    %v200 = vpop.f32.mrb[0].mxu0
    %v201 = vadd.f32 %v77, %v200
    %v202 = vpop.f32.mrb[0].mxu0
    %v203 = vadd.f32 %v73, %v202
    %v204 = vpop.f32.mrb[0].mxu0
    %v205 = vadd.f32 %v77, %v204
    %206 = vmatprep.mubr.bf16.mxu0 0
    %207 = vmatmul.mubr.bf16.gmra.mrb[0].mxu0 %v136
    %v208 = vpop.f32.mrb[0].mxu0
    %v209 = vadd.f32 %v73, %v208
    %v210 = vpop.f32.mrb[0].mxu0
    %v211 = vadd.f32 %v77, %v210
    %v212 = vpop.f32.mrb[0].mxu0
    %v213 = vadd.f32 %v73, %v212
    %v214 = vpop.f32.mrb[0].mxu0
    %v215 = vadd.f32 %v77, %v214
    %216 = vmatprep.mubr.bf16.mxu0 0
    %217 = vmatmul.mubr.bf16.gmra.mrb[0].mxu0 %v139
    %v218 = vpop.f32.mrb[0].mxu0
    %v219 = vadd.f32 %v73, %v218
    %v220 = vpop.f32.mrb[0].mxu0
    %v221 = vadd.f32 %v77, %v220
    %v222 = vpop.f32.mrb[0].mxu0
    %v223 = vadd.f32 %v73, %v222
    %v224 = vpop.f32.mrb[0].mxu0
    %v225 = vadd.f32 %v77, %v224
    %226 = vdwg.mxu0
    %227 = vmatprep.subr.bf16.mxu0 %v152
    %228 = vmatpush1.bf16.msra.mxu0 %v149
    %229 = vmatprep.subr.bf16.mxu0 0
    %230 = vmatpush1.bf16.msra.mxu0 0
    %231 = vmatprep.subr.bf16.mxu0 0
    %232 = vmatpush1.bf16.msra.mxu0 0
    %233 = vmatprep.subr.bf16.mxu0 0
    %234 = vmatpush1.bf16.msra.mxu0 0
    %235 = vmatprep.subr.bf16.mxu0 0
    %236 = vmatpush1.bf16.msra.mxu0 0
    %237 = vmatprep.subr.bf16.mxu0 0
    %238 = vmatpush1.bf16.msra.mxu0 0
    %239 = vmatprep.subr.bf16.mxu0 0
    %240 = vmatpush1.bf16.msra.mxu0 0
    %241 = vmatprep.subr.bf16.mxu0 0
    %242 = vmatpush1.bf16.msra.mxu0 0
    %243 = vmatprep.subr.bf16.mxu0 0
    %244 = vmatpush1.bf16.msra.mxu0 0
    %245 = vmatprep.subr.bf16.mxu0 0
    %246 = vmatpush1.bf16.msra.mxu0 0
    %247 = vmatprep.subr.bf16.mxu0 0
    %248 = vmatpush1.bf16.msra.mxu0 0
    %249 = vmatprep.subr.bf16.mxu0 0
    %250 = vmatpush1.bf16.msra.mxu0 0
    %251 = vmatprep.subr.bf16.mxu0 0
    %252 = vmatpush1.bf16.msra.mxu0 0
    %253 = vmatprep.subr.bf16.mxu0 0
    %254 = vmatpush1.bf16.msra.mxu0 0
    %255 = vmatprep.subr.bf16.mxu0 0
    %256 = vmatpush1.bf16.msra.mxu0 0
    %257 = vmatprep.subr.bf16.mxu0 0
    %258 = vmatpush1.bf16.msra.mxu0 0
    %259 = vmatprep.mubr.bf16.mxu0 0
    %260 = vmatmul.mubr.bf16.gmra.mrb[0].mxu0 %v130
    %v261 = vpop.f32.mrb[0].mxu0
    %v262 = vadd.f32 %v81, %v261
    %v263 = vpop.f32.mrb[0].mxu0
    %v264 = vadd.f32 %v85, %v263
    %v265 = vpop.f32.mrb[0].mxu0
    %v266 = vadd.f32 %v81, %v265
    %v267 = vpop.f32.mrb[0].mxu0
    %v268 = vadd.f32 %v85, %v267
    %269 = vmatprep.mubr.bf16.mxu0 0
    %270 = vmatmul.mubr.bf16.gmra.mrb[0].mxu0 %v133
    %v271 = vpop.f32.mrb[0].mxu0
    %v272 = vadd.f32 %v81, %v271
    %v273 = vpop.f32.mrb[0].mxu0
    %v274 = vadd.f32 %v85, %v273
    %v275 = vpop.f32.mrb[0].mxu0
    %v276 = vadd.f32 %v81, %v275
    %v277 = vpop.f32.mrb[0].mxu0
    %v278 = vadd.f32 %v85, %v277
    %279 = vmatprep.mubr.bf16.mxu0 0
    %280 = vmatmul.mubr.bf16.gmra.mrb[0].mxu0 %v136
    %v281 = vpop.f32.mrb[0].mxu0
    %v282 = vadd.f32 %v81, %v281
    %v283 = vpop.f32.mrb[0].mxu0
    %v284 = vadd.f32 %v85, %v283
    %v285 = vpop.f32.mrb[0].mxu0
    %v286 = vadd.f32 %v81, %v285
    %v287 = vpop.f32.mrb[0].mxu0
    %v288 = vadd.f32 %v85, %v287
    %289 = vmatprep.mubr.bf16.mxu0 0
    %290 = vmatmul.mubr.bf16.gmra.mrb[0].mxu0 %v139
    %v291 = vpop.f32.mrb[0].mxu0
    %v292 = vadd.f32 %v81, %v291
    %v293 = vpop.f32.mrb[0].mxu0
    %v294 = vadd.f32 %v85, %v293
    %v295 = vpop.f32.mrb[0].mxu0
    %v296 = vadd.f32 %v81, %v295
    %v297 = vpop.f32.mrb[0].mxu0
    %v298 = vadd.f32 %v85, %v297
    %299 = vdwg.mxu0
    %v300 = vld [vmem:[#allocation4] sm:$0xff]
    %v301 = vld [vmem:[#allocation4 + $0x8] sm:$0xff]
    %v302 = vld [vmem:[#allocation4 + $0x10] sm:$0xff]
    %v303 = vld [vmem:[#allocation4 + $0x18] sm:$0xff]
    %v304 = vld [vmem:[#allocation4 + $0x20] sm:$0xff]
    %v305 = vld [vmem:[#allocation4 + $0x28] sm:$0xff]
    %v306 = vld [vmem:[#allocation4 + $0x30] sm:$0xff]
    %v307 = vld [vmem:[#allocation4 + $0x38] sm:$0xff]
    %v308 = vld [vmem:[#allocation4 + $0x40] sm:$0xff]
    %v309 = vld [vmem:[#allocation4 + $0x48] sm:$0xff]
    %v310 = vld [vmem:[#allocation4 + $0x50] sm:$0xff]
    %v311 = vld [vmem:[#allocation4 + $0x58] sm:$0xff]
    %v312 = vld [vmem:[#allocation4 + $0x60] sm:$0xff]
    %v313 = vld [vmem:[#allocation4 + $0x68] sm:$0xff]
    %v314 = vld [vmem:[#allocation4 + $0x70] sm:$0xff]
    %v315 = vld [vmem:[#allocation4 + $0x78] sm:$0xff]
    %v316 = vld [vmem:[#allocation4 + $0x80] sm:$0xff]
    %v317 = vld [vmem:[#allocation4 + $0x88] sm:$0xff]
    %v318 = vld [vmem:[#allocation4 + $0x90] sm:$0xff]
    %v319 = vld [vmem:[#allocation4 + $0x98] sm:$0xff]
    %v320 = vld [vmem:[#allocation4 + $0xa0] sm:$0xff]
    %v321 = vld [vmem:[#allocation4 + $0xa8] sm:$0xff]
    %v322 = vld [vmem:[#allocation4 + $0xb0] sm:$0xff]
    %v323 = vld [vmem:[#allocation4 + $0xb8] sm:$0xff]
    %v324 = vld [vmem:[#allocation4 + $0xc0] sm:$0xff]
    %v325 = vld [vmem:[#allocation4 + $0xc8] sm:$0xff]
    %v326 = vld [vmem:[#allocation4 + $0xd0] sm:$0xff]
    %v327 = vld [vmem:[#allocation4 + $0xd8] sm:$0xff]
    %v328 = vld [vmem:[#allocation4 + $0xe0] sm:$0xff]
    %v329 = vld [vmem:[#allocation4 + $0xe8] sm:$0xff]
    %v330 = vld [vmem:[#allocation4 + $0xf0] sm:$0xff]
    %v331 = vld [vmem:[#allocation4 + $0xf8] sm:$0xff]
    %v332 = vld [vmem:[#allocation2] sm:$0xff]
    %v333 = vld [vmem:[#allocation3] sm:$0xff]
    %v334 = vpack.c.bf16 %v332, %v332
    %v367 = vunpack.c.l.b16 %v300
    %v368 = vunpack.c.h.b16 %v300
    %v369 = vunpack.c.l.b16 %v301
    %v370 = vunpack.c.h.b16 %v301
    %v371 = vunpack.c.l.b16 %v302
    %v372 = vunpack.c.h.b16 %v302
    %v373 = vunpack.c.l.b16 %v303
    %v374 = vunpack.c.h.b16 %v303
    %v375 = vunpack.c.l.b16 %v304
    %v376 = vunpack.c.h.b16 %v304
    %v377 = vunpack.c.l.b16 %v305
    %v378 = vunpack.c.h.b16 %v305
    %v379 = vunpack.c.l.b16 %v306
    %v380 = vunpack.c.h.b16 %v306
    %v381 = vunpack.c.l.b16 %v307
    %v382 = vunpack.c.h.b16 %v307
    %v383 = vunpack.c.l.b16 %v308
    %v384 = vunpack.c.h.b16 %v308
    %v385 = vunpack.c.l.b16 %v309
    %v386 = vunpack.c.h.b16 %v309
    %v387 = vunpack.c.l.b16 %v310
    %v388 = vunpack.c.h.b16 %v310
    %v389 = vunpack.c.l.b16 %v311
    %v390 = vunpack.c.h.b16 %v311
    %v391 = vunpack.c.l.b16 %v312
    %v392 = vunpack.c.h.b16 %v312
    %v393 = vunpack.c.l.b16 %v313
    %v394 = vunpack.c.h.b16 %v313
    %v395 = vunpack.c.l.b16 %v314
    %v396 = vunpack.c.h.b16 %v314
    %v397 = vunpack.c.l.b16 %v315
    %v398 = vunpack.c.h.b16 %v315
    %v399 = vunpack.c.l.b16 %v316
    %v400 = vunpack.c.h.b16 %v316
    %v401 = vunpack.c.l.b16 %v317
    %v402 = vunpack.c.h.b16 %v317
    %v403 = vunpack.c.l.b16 %v318
    %v404 = vunpack.c.h.b16 %v318
    %v405 = vunpack.c.l.b16 %v319
    %v406 = vunpack.c.h.b16 %v319
    %v407 = vunpack.c.l.b16 %v320
    %v408 = vunpack.c.h.b16 %v320
    %v409 = vunpack.c.l.b16 %v321
    %v410 = vunpack.c.h.b16 %v321
    %v411 = vunpack.c.l.b16 %v322
    %v412 = vunpack.c.h.b16 %v322
    %v413 = vunpack.c.l.b16 %v323
    %v414 = vunpack.c.h.b16 %v323
    %v415 = vunpack.c.l.b16 %v324
    %v416 = vunpack.c.h.b16 %v324
    %v417 = vunpack.c.l.b16 %v325
    %v418 = vunpack.c.h.b16 %v325
    %v419 = vunpack.c.l.b16 %v326
    %v420 = vunpack.c.h.b16 %v326
    %v421 = vunpack.c.l.b16 %v327
    %v422 = vunpack.c.h.b16 %v327
    %v423 = vunpack.c.l.b16 %v328
    %v424 = vunpack.c.h.b16 %v328
    %v425 = vunpack.c.l.b16 %v329
    %v426 = vunpack.c.h.b16 %v329
    %v427 = vunpack.c.l.b16 %v330
    %v428 = vunpack.c.h.b16 %v330
    %v429 = vunpack.c.l.b16 %v331
    %v430 = vunpack.c.h.b16 %v331
    %v431 = vpack.c.b16 %v371, %v367
    %v432 = vpack.c.b16 %v372, %v368
    %v433 = vpack.c.b16 %v373, %v369
    %v434 = vpack.c.b16 %v374, %v370
    %v435 = vpack.c.b16 %v379, %v375
    %v436 = vpack.c.b16 %v380, %v376
    %v437 = vpack.c.b16 %v381, %v377
    %v438 = vpack.c.b16 %v382, %v378
    %v439 = vpack.c.b16 %v387, %v383
    %v440 = vpack.c.b16 %v388, %v384
    %v441 = vpack.c.b16 %v389, %v385
    %v442 = vpack.c.b16 %v390, %v386
    %v443 = vpack.c.b16 %v395, %v391
    %v444 = vpack.c.b16 %v396, %v392
    %v445 = vpack.c.b16 %v397, %v393
    %v446 = vpack.c.b16 %v398, %v394
    %v447 = vpack.c.b16 %v403, %v399
    %v448 = vpack.c.b16 %v404, %v400
    %v449 = vpack.c.b16 %v405, %v401
    %v450 = vpack.c.b16 %v406, %v402
    %v451 = vpack.c.b16 %v411, %v407
    %v452 = vpack.c.b16 %v412, %v408
    %v453 = vpack.c.b16 %v413, %v409
    %v454 = vpack.c.b16 %v414, %v410
    %v455 = vpack.c.b16 %v419, %v415
    %v456 = vpack.c.b16 %v420, %v416
    %v457 = vpack.c.b16 %v421, %v417
    %v458 = vpack.c.b16 %v422, %v418
    %v459 = vpack.c.b16 %v427, %v423
    %v460 = vpack.c.b16 %v428, %v424
    %v461 = vpack.c.b16 %v429, %v425
    %v462 = vpack.c.b16 %v430, %v426
    %495 = vmatprep.subr.bf16.mxu0 %v432
    %496 = vmatpush1.bf16.msra.mxu0 %v431
    %497 = vmatprep.subr.bf16.mxu0 %v436
    %498 = vmatpush1.bf16.msra.mxu0 %v435
    %499 = vmatprep.subr.bf16.mxu0 %v440
    %500 = vmatpush1.bf16.msra.mxu0 %v439
    %501 = vmatprep.subr.bf16.mxu0 %v444
    %502 = vmatpush1.bf16.msra.mxu0 %v443
    %503 = vmatprep.subr.bf16.mxu0 %v448
    %504 = vmatpush1.bf16.msra.mxu0 %v447
    %505 = vmatprep.subr.bf16.mxu0 %v452
    %506 = vmatpush1.bf16.msra.mxu0 %v451
    %507 = vmatprep.subr.bf16.mxu0 %v456
    %508 = vmatpush1.bf16.msra.mxu0 %v455
    %509 = vmatprep.subr.bf16.mxu0 %v460
    %510 = vmatpush1.bf16.msra.mxu0 %v459
    %511 = vmatprep.subr.bf16.mxu0 0
    %512 = vmatpush1.bf16.msra.mxu0 0
    %513 = vmatprep.subr.bf16.mxu0 0
    %514 = vmatpush1.bf16.msra.mxu0 0
    %515 = vmatprep.subr.bf16.mxu0 0
    %516 = vmatpush1.bf16.msra.mxu0 0
    %517 = vmatprep.subr.bf16.mxu0 0
    %518 = vmatpush1.bf16.msra.mxu0 0
    %519 = vmatprep.subr.bf16.mxu0 0
    %520 = vmatpush1.bf16.msra.mxu0 0
    %521 = vmatprep.subr.bf16.mxu0 0
    %522 = vmatpush1.bf16.msra.mxu0 0
    %523 = vmatprep.subr.bf16.mxu0 0
    %524 = vmatpush1.bf16.msra.mxu0 0
    %525 = vmatprep.subr.bf16.mxu0 0
    %526 = vmatpush1.bf16.msra.mxu0 0
    %527 = vmatprep.mubr.bf16.mxu0 0
    %528 = vmatmul.mubr.bf16.gmra.mrb[0].mxu0 %v334
    %v529 = vpop.f32.mrb[0].mxu0
    %v530 = vadd.f32 0.0, %v529
    %v531 = vpop.f32.mrb[0].mxu0
    %v532 = vadd.f32 0.0, %v531
    %v533 = vpop.f32.mrb[0].mxu0
    %v534 = vpop.f32.mrb[0].mxu0
    %535 = vdwg.mxu0
    %536 = vmatprep.subr.bf16.mxu0 %v434
    %537 = vmatpush1.bf16.msra.mxu0 %v433
    %538 = vmatprep.subr.bf16.mxu0 %v438
    %539 = vmatpush1.bf16.msra.mxu0 %v437
    %540 = vmatprep.subr.bf16.mxu0 %v442
    %541 = vmatpush1.bf16.msra.mxu0 %v441
    %542 = vmatprep.subr.bf16.mxu0 %v446
    %543 = vmatpush1.bf16.msra.mxu0 %v445
    %544 = vmatprep.subr.bf16.mxu0 %v450
    %545 = vmatpush1.bf16.msra.mxu0 %v449
    %546 = vmatprep.subr.bf16.mxu0 %v454
    %547 = vmatpush1.bf16.msra.mxu0 %v453
    %548 = vmatprep.subr.bf16.mxu0 %v458
    %549 = vmatpush1.bf16.msra.mxu0 %v457
    %550 = vmatprep.subr.bf16.mxu0 %v462
    %551 = vmatpush1.bf16.msra.mxu0 %v461
    %552 = vmatprep.subr.bf16.mxu0 0
    %553 = vmatpush1.bf16.msra.mxu0 0
    %554 = vmatprep.subr.bf16.mxu0 0
    %555 = vmatpush1.bf16.msra.mxu0 0
    %556 = vmatprep.subr.bf16.mxu0 0
    %557 = vmatpush1.bf16.msra.mxu0 0
    %558 = vmatprep.subr.bf16.mxu0 0
    %559 = vmatpush1.bf16.msra.mxu0 0
    %560 = vmatprep.subr.bf16.mxu0 0
    %561 = vmatpush1.bf16.msra.mxu0 0
    %562 = vmatprep.subr.bf16.mxu0 0
    %563 = vmatpush1.bf16.msra.mxu0 0
    %564 = vmatprep.subr.bf16.mxu0 0
    %565 = vmatpush1.bf16.msra.mxu0 0
    %566 = vmatprep.subr.bf16.mxu0 0
    %567 = vmatpush1.bf16.msra.mxu0 0
    %568 = vmatprep.mubr.bf16.mxu0 0
    %569 = vmatmul.mubr.bf16.gmra.mrb[0].mxu0 %v334
    %v570 = vpop.f32.mrb[0].mxu0
    %v571 = vadd.f32 0.0, %v570
    %v572 = vpop.f32.mrb[0].mxu0
    %v573 = vadd.f32 0.0, %v572
    %v574 = vpop.f32.mrb[0].mxu0
    %v575 = vpop.f32.mrb[0].mxu0
    %576 = vdwg.mxu0
    %v577 = vadd.f32 %v189, %v530
    %v578 = vadd.f32 %v191, %v532
    %v579 = vadd.f32 %v262, %v571
    %v580 = vadd.f32 %v264, %v573
    %v581 = vxor.u32 %v577, 2147483648
    %v582 = vmul.f32 %v581, 1.442695
    %v583 = vpow.pop %v582
    %v584 = vadd.f32 %v583, 1.0
    %v585 = vrcp.pop %v584
    %v586 = vmul.f32 1.0, %v585
    %v587 = vxor.u32 %v578, 2147483648
    %v588 = vmul.f32 %v587, 1.442695
    %v589 = vpow.pop %v588
    %v590 = vadd.f32 %v589, 1.0
    %v591 = vrcp.pop %v590
    %v592 = vmul.f32 1.0, %v591
    %v593 = vtanh.pop %v579
    %v594 = vxor.u32 %v580, 2147483648
    %v595 = vmul.f32 %v594, 1.442695
    %v596 = vpow.pop %v595
    %v597 = vadd.f32 %v596, 1.0
    %v598 = vrcp.pop %v597
    %v599 = vmul.f32 1.0, %v598
    %v600 = vmul.f32 %v592, %v333
    %v601 = vmul.f32 %v586, %v593
    %v602 = vadd.f32 %v600, %v601
    %v603 = vtanh.pop %v602
    %v604 = vmul.f32 %v599, %v603
    %v605 = vpack.c.bf16 %v604, %v604
    %606 = vmatprep.subr.bf16.mxu0 %v432
    %607 = vmatpush1.bf16.msra.mxu0 %v431
    %608 = vmatprep.subr.bf16.mxu0 %v436
    %609 = vmatpush1.bf16.msra.mxu0 %v435
    %610 = vmatprep.subr.bf16.mxu0 %v440
    %611 = vmatpush1.bf16.msra.mxu0 %v439
    %612 = vmatprep.subr.bf16.mxu0 %v444
    %613 = vmatpush1.bf16.msra.mxu0 %v443
    %614 = vmatprep.subr.bf16.mxu0 %v448
    %615 = vmatpush1.bf16.msra.mxu0 %v447
    %616 = vmatprep.subr.bf16.mxu0 %v452
    %617 = vmatpush1.bf16.msra.mxu0 %v451
    %618 = vmatprep.subr.bf16.mxu0 %v456
    %619 = vmatpush1.bf16.msra.mxu0 %v455
    %620 = vmatprep.subr.bf16.mxu0 %v460
    %621 = vmatpush1.bf16.msra.mxu0 %v459
    %622 = vmatprep.subr.bf16.mxu0 0
    %623 = vmatpush1.bf16.msra.mxu0 0
    %624 = vmatprep.subr.bf16.mxu0 0
    %625 = vmatpush1.bf16.msra.mxu0 0
    %626 = vmatprep.subr.bf16.mxu0 0
    %627 = vmatpush1.bf16.msra.mxu0 0
    %628 = vmatprep.subr.bf16.mxu0 0
    %629 = vmatpush1.bf16.msra.mxu0 0
    %630 = vmatprep.subr.bf16.mxu0 0
    %631 = vmatpush1.bf16.msra.mxu0 0
    %632 = vmatprep.subr.bf16.mxu0 0
    %633 = vmatpush1.bf16.msra.mxu0 0
    %634 = vmatprep.subr.bf16.mxu0 0
    %635 = vmatpush1.bf16.msra.mxu0 0
    %636 = vmatprep.subr.bf16.mxu0 0
    %637 = vmatpush1.bf16.msra.mxu0 0
    %638 = vmatprep.mubr.bf16.mxu0 0
    %639 = vmatmul.mubr.bf16.gmra.mrb[0].mxu0 %v605
    %v640 = vpop.f32.mrb[0].mxu0
    %v641 = vadd.f32 0.0, %v640
    %v642 = vpop.f32.mrb[0].mxu0
    %v643 = vadd.f32 0.0, %v642
    %v644 = vpop.f32.mrb[0].mxu0
    %v645 = vpop.f32.mrb[0].mxu0
    %646 = vdwg.mxu0
    %647 = vmatprep.subr.bf16.mxu0 %v434
    %648 = vmatpush1.bf16.msra.mxu0 %v433
    %649 = vmatprep.subr.bf16.mxu0 %v438
    %650 = vmatpush1.bf16.msra.mxu0 %v437
    %651 = vmatprep.subr.bf16.mxu0 %v442
    %652 = vmatpush1.bf16.msra.mxu0 %v441
    %653 = vmatprep.subr.bf16.mxu0 %v446
    %654 = vmatpush1.bf16.msra.mxu0 %v445
    %655 = vmatprep.subr.bf16.mxu0 %v450
    %656 = vmatpush1.bf16.msra.mxu0 %v449
    %657 = vmatprep.subr.bf16.mxu0 %v454
    %658 = vmatpush1.bf16.msra.mxu0 %v453
    %659 = vmatprep.subr.bf16.mxu0 %v458
    %660 = vmatpush1.bf16.msra.mxu0 %v457
    %661 = vmatprep.subr.bf16.mxu0 %v462
    %662 = vmatpush1.bf16.msra.mxu0 %v461
    %663 = vmatprep.subr.bf16.mxu0 0
    %664 = vmatpush1.bf16.msra.mxu0 0
    %665 = vmatprep.subr.bf16.mxu0 0
    %666 = vmatpush1.bf16.msra.mxu0 0
    %667 = vmatprep.subr.bf16.mxu0 0
    %668 = vmatpush1.bf16.msra.mxu0 0
    %669 = vmatprep.subr.bf16.mxu0 0
    %670 = vmatpush1.bf16.msra.mxu0 0
    %671 = vmatprep.subr.bf16.mxu0 0
    %672 = vmatpush1.bf16.msra.mxu0 0
    %673 = vmatprep.subr.bf16.mxu0 0
    %674 = vmatpush1.bf16.msra.mxu0 0
    %675 = vmatprep.subr.bf16.mxu0 0
    %676 = vmatpush1.bf16.msra.mxu0 0
    %677 = vmatprep.subr.bf16.mxu0 0
    %678 = vmatpush1.bf16.msra.mxu0 0
    %679 = vmatprep.mubr.bf16.mxu0 0
    %680 = vmatmul.mubr.bf16.gmra.mrb[0].mxu0 %v605
    %v681 = vpop.f32.mrb[0].mxu0
    %v682 = vadd.f32 0.0, %v681
    %v683 = vpop.f32.mrb[0].mxu0
    %v684 = vadd.f32 0.0, %v683
    %v685 = vpop.f32.mrb[0].mxu0
    %v686 = vpop.f32.mrb[0].mxu0
    %687 = vdwg.mxu0
    %v688 = vadd.f32 %v193, %v641
    %v689 = vadd.f32 %v195, %v643
    %v690 = vadd.f32 %v266, %v682
    %v691 = vadd.f32 %v268, %v684
    %v692 = vxor.u32 %v688, 2147483648
    %v693 = vmul.f32 %v692, 1.442695
    %v694 = vpow.pop %v693
    %v695 = vadd.f32 %v694, 1.0
    %v696 = vrcp.pop %v695
    %v697 = vmul.f32 1.0, %v696
    %v698 = vxor.u32 %v689, 2147483648
    %v699 = vmul.f32 %v698, 1.442695
    %v700 = vpow.pop %v699
    %v701 = vadd.f32 %v700, 1.0
    %v702 = vrcp.pop %v701
    %v703 = vmul.f32 1.0, %v702
    %v704 = vtanh.pop %v690
    %v705 = vxor.u32 %v691, 2147483648
    %v706 = vmul.f32 %v705, 1.442695
    %v707 = vpow.pop %v706
    %v708 = vadd.f32 %v707, 1.0
    %v709 = vrcp.pop %v708
    %v710 = vmul.f32 1.0, %v709
    %v711 = vmul.f32 %v703, %v602
    %v712 = vmul.f32 %v697, %v704
    %v713 = vadd.f32 %v711, %v712
    %v714 = vtanh.pop %v713
    %v715 = vmul.f32 %v710, %v714
    %v716 = vpack.c.bf16 %v715, %v715
    %717 = vmatprep.subr.bf16.mxu0 %v432
    %718 = vmatpush1.bf16.msra.mxu0 %v431
    %719 = vmatprep.subr.bf16.mxu0 %v436
    %720 = vmatpush1.bf16.msra.mxu0 %v435
    %721 = vmatprep.subr.bf16.mxu0 %v440
    %722 = vmatpush1.bf16.msra.mxu0 %v439
    %723 = vmatprep.subr.bf16.mxu0 %v444
    %724 = vmatpush1.bf16.msra.mxu0 %v443
    %725 = vmatprep.subr.bf16.mxu0 %v448
    %726 = vmatpush1.bf16.msra.mxu0 %v447
    %727 = vmatprep.subr.bf16.mxu0 %v452
    %728 = vmatpush1.bf16.msra.mxu0 %v451
    %729 = vmatprep.subr.bf16.mxu0 %v456
    %730 = vmatpush1.bf16.msra.mxu0 %v455
    %731 = vmatprep.subr.bf16.mxu0 %v460
    %732 = vmatpush1.bf16.msra.mxu0 %v459
    %733 = vmatprep.subr.bf16.mxu0 0
    %734 = vmatpush1.bf16.msra.mxu0 0
    %735 = vmatprep.subr.bf16.mxu0 0
    %736 = vmatpush1.bf16.msra.mxu0 0
    %737 = vmatprep.subr.bf16.mxu0 0
    %738 = vmatpush1.bf16.msra.mxu0 0
    %739 = vmatprep.subr.bf16.mxu0 0
    %740 = vmatpush1.bf16.msra.mxu0 0
    %741 = vmatprep.subr.bf16.mxu0 0
    %742 = vmatpush1.bf16.msra.mxu0 0
    %743 = vmatprep.subr.bf16.mxu0 0
    %744 = vmatpush1.bf16.msra.mxu0 0
    %745 = vmatprep.subr.bf16.mxu0 0
    %746 = vmatpush1.bf16.msra.mxu0 0
    %747 = vmatprep.subr.bf16.mxu0 0
    %748 = vmatpush1.bf16.msra.mxu0 0
    %749 = vmatprep.mubr.bf16.mxu0 0
    %750 = vmatmul.mubr.bf16.gmra.mrb[0].mxu0 %v716
    %v751 = vpop.f32.mrb[0].mxu0
    %v752 = vadd.f32 0.0, %v751
    %v753 = vpop.f32.mrb[0].mxu0
    %v754 = vadd.f32 0.0, %v753
    %v755 = vpop.f32.mrb[0].mxu0
    %v756 = vpop.f32.mrb[0].mxu0
    %757 = vdwg.mxu0
    %758 = vmatprep.subr.bf16.mxu0 %v434
    %759 = vmatpush1.bf16.msra.mxu0 %v433
    %760 = vmatprep.subr.bf16.mxu0 %v438
    %761 = vmatpush1.bf16.msra.mxu0 %v437
    %762 = vmatprep.subr.bf16.mxu0 %v442
    %763 = vmatpush1.bf16.msra.mxu0 %v441
    %764 = vmatprep.subr.bf16.mxu0 %v446
    %765 = vmatpush1.bf16.msra.mxu0 %v445
    %766 = vmatprep.subr.bf16.mxu0 %v450
    %767 = vmatpush1.bf16.msra.mxu0 %v449
    %768 = vmatprep.subr.bf16.mxu0 %v454
    %769 = vmatpush1.bf16.msra.mxu0 %v453
    %770 = vmatprep.subr.bf16.mxu0 %v458
    %771 = vmatpush1.bf16.msra.mxu0 %v457
    %772 = vmatprep.subr.bf16.mxu0 %v462
    %773 = vmatpush1.bf16.msra.mxu0 %v461
    %774 = vmatprep.subr.bf16.mxu0 0
    %775 = vmatpush1.bf16.msra.mxu0 0
    %776 = vmatprep.subr.bf16.mxu0 0
    %777 = vmatpush1.bf16.msra.mxu0 0
    %778 = vmatprep.subr.bf16.mxu0 0
    %779 = vmatpush1.bf16.msra.mxu0 0
    %780 = vmatprep.subr.bf16.mxu0 0
    %781 = vmatpush1.bf16.msra.mxu0 0
    %782 = vmatprep.subr.bf16.mxu0 0
    %783 = vmatpush1.bf16.msra.mxu0 0
    %784 = vmatprep.subr.bf16.mxu0 0
    %785 = vmatpush1.bf16.msra.mxu0 0
    %786 = vmatprep.subr.bf16.mxu0 0
    %787 = vmatpush1.bf16.msra.mxu0 0
    %788 = vmatprep.subr.bf16.mxu0 0
    %789 = vmatpush1.bf16.msra.mxu0 0
    %790 = vmatprep.mubr.bf16.mxu0 0
    %791 = vmatmul.mubr.bf16.gmra.mrb[0].mxu0 %v716
    %v792 = vpop.f32.mrb[0].mxu0
    %v793 = vadd.f32 0.0, %v792
    %v794 = vpop.f32.mrb[0].mxu0
    %v795 = vadd.f32 0.0, %v794
    %v796 = vpop.f32.mrb[0].mxu0
    %v797 = vpop.f32.mrb[0].mxu0
    %798 = vdwg.mxu0
    %v799 = vadd.f32 %v199, %v752
    %v800 = vadd.f32 %v201, %v754
    %v801 = vadd.f32 %v272, %v793
    %v802 = vadd.f32 %v274, %v795
    %v803 = vxor.u32 %v799, 2147483648
    %v804 = vmul.f32 %v803, 1.442695
    %v805 = vpow.pop %v804
    %v806 = vadd.f32 %v805, 1.0
    %v807 = vrcp.pop %v806
    %v808 = vmul.f32 1.0, %v807
    %v809 = vxor.u32 %v800, 2147483648
    %v810 = vmul.f32 %v809, 1.442695
    %v811 = vpow.pop %v810
    %v812 = vadd.f32 %v811, 1.0
    %v813 = vrcp.pop %v812
    %v814 = vmul.f32 1.0, %v813
    %v815 = vtanh.pop %v801
    %v816 = vxor.u32 %v802, 2147483648
    %v817 = vmul.f32 %v816, 1.442695
    %v818 = vpow.pop %v817
    %v819 = vadd.f32 %v818, 1.0
    %v820 = vrcp.pop %v819
    %v821 = vmul.f32 1.0, %v820
    %v822 = vmul.f32 %v814, %v713
    %v823 = vmul.f32 %v808, %v815
    %v824 = vadd.f32 %v822, %v823
    %v825 = vtanh.pop %v824
    %v826 = vmul.f32 %v821, %v825
    %v827 = vpack.c.bf16 %v826, %v826
    %828 = vmatprep.subr.bf16.mxu0 %v432
    %829 = vmatpush1.bf16.msra.mxu0 %v431
    %830 = vmatprep.subr.bf16.mxu0 %v436
    %831 = vmatpush1.bf16.msra.mxu0 %v435
    %832 = vmatprep.subr.bf16.mxu0 %v440
    %833 = vmatpush1.bf16.msra.mxu0 %v439
    %834 = vmatprep.subr.bf16.mxu0 %v444
    %835 = vmatpush1.bf16.msra.mxu0 %v443
    %836 = vmatprep.subr.bf16.mxu0 %v448
    %837 = vmatpush1.bf16.msra.mxu0 %v447
    %838 = vmatprep.subr.bf16.mxu0 %v452
    %839 = vmatpush1.bf16.msra.mxu0 %v451
    %840 = vmatprep.subr.bf16.mxu0 %v456
    %841 = vmatpush1.bf16.msra.mxu0 %v455
    %842 = vmatprep.subr.bf16.mxu0 %v460
    %843 = vmatpush1.bf16.msra.mxu0 %v459
    %844 = vmatprep.subr.bf16.mxu0 0
    %845 = vmatpush1.bf16.msra.mxu0 0
    %846 = vmatprep.subr.bf16.mxu0 0
    %847 = vmatpush1.bf16.msra.mxu0 0
    %848 = vmatprep.subr.bf16.mxu0 0
    %849 = vmatpush1.bf16.msra.mxu0 0
    %850 = vmatprep.subr.bf16.mxu0 0
    %851 = vmatpush1.bf16.msra.mxu0 0
    %852 = vmatprep.subr.bf16.mxu0 0
    %853 = vmatpush1.bf16.msra.mxu0 0
    %854 = vmatprep.subr.bf16.mxu0 0
    %855 = vmatpush1.bf16.msra.mxu0 0
    %856 = vmatprep.subr.bf16.mxu0 0
    %857 = vmatpush1.bf16.msra.mxu0 0
    %858 = vmatprep.subr.bf16.mxu0 0
    %859 = vmatpush1.bf16.msra.mxu0 0
    %860 = vmatprep.mubr.bf16.mxu0 0
    %861 = vmatmul.mubr.bf16.gmra.mrb[0].mxu0 %v827
    %v862 = vpop.f32.mrb[0].mxu0
    %v863 = vadd.f32 0.0, %v862
    %v864 = vpop.f32.mrb[0].mxu0
    %v865 = vadd.f32 0.0, %v864
    %v866 = vpop.f32.mrb[0].mxu0
    %v867 = vpop.f32.mrb[0].mxu0
    %868 = vdwg.mxu0
    %869 = vmatprep.subr.bf16.mxu0 %v434
    %870 = vmatpush1.bf16.msra.mxu0 %v433
    %871 = vmatprep.subr.bf16.mxu0 %v438
    %872 = vmatpush1.bf16.msra.mxu0 %v437
    %873 = vmatprep.subr.bf16.mxu0 %v442
    %874 = vmatpush1.bf16.msra.mxu0 %v441
    %875 = vmatprep.subr.bf16.mxu0 %v446
    %876 = vmatpush1.bf16.msra.mxu0 %v445
    %877 = vmatprep.subr.bf16.mxu0 %v450
    %878 = vmatpush1.bf16.msra.mxu0 %v449
    %879 = vmatprep.subr.bf16.mxu0 %v454
    %880 = vmatpush1.bf16.msra.mxu0 %v453
    %881 = vmatprep.subr.bf16.mxu0 %v458
    %882 = vmatpush1.bf16.msra.mxu0 %v457
    %883 = vmatprep.subr.bf16.mxu0 %v462
    %884 = vmatpush1.bf16.msra.mxu0 %v461
    %885 = vmatprep.subr.bf16.mxu0 0
    %886 = vmatpush1.bf16.msra.mxu0 0
    %887 = vmatprep.subr.bf16.mxu0 0
    %888 = vmatpush1.bf16.msra.mxu0 0
    %889 = vmatprep.subr.bf16.mxu0 0
    %890 = vmatpush1.bf16.msra.mxu0 0
    %891 = vmatprep.subr.bf16.mxu0 0
    %892 = vmatpush1.bf16.msra.mxu0 0
    %893 = vmatprep.subr.bf16.mxu0 0
    %894 = vmatpush1.bf16.msra.mxu0 0
    %895 = vmatprep.subr.bf16.mxu0 0
    %896 = vmatpush1.bf16.msra.mxu0 0
    %897 = vmatprep.subr.bf16.mxu0 0
    %898 = vmatpush1.bf16.msra.mxu0 0
    %899 = vmatprep.subr.bf16.mxu0 0
    %900 = vmatpush1.bf16.msra.mxu0 0
    %901 = vmatprep.mubr.bf16.mxu0 0
    %902 = vmatmul.mubr.bf16.gmra.mrb[0].mxu0 %v827
    %v903 = vpop.f32.mrb[0].mxu0
    %v904 = vadd.f32 0.0, %v903
    %v905 = vpop.f32.mrb[0].mxu0
    %v906 = vadd.f32 0.0, %v905
    %v907 = vpop.f32.mrb[0].mxu0
    %v908 = vpop.f32.mrb[0].mxu0
    %909 = vdwg.mxu0
    %v910 = vadd.f32 %v203, %v863
    %v911 = vadd.f32 %v205, %v865
    %v912 = vadd.f32 %v276, %v904
    %v913 = vadd.f32 %v278, %v906
    %v914 = vxor.u32 %v910, 2147483648
    %v915 = vmul.f32 %v914, 1.442695
    %v916 = vpow.pop %v915
    %v917 = vadd.f32 %v916, 1.0
    %v918 = vrcp.pop %v917
    %v919 = vmul.f32 1.0, %v918
    %v920 = vxor.u32 %v911, 2147483648
    %v921 = vmul.f32 %v920, 1.442695
    %v922 = vpow.pop %v921
    %v923 = vadd.f32 %v922, 1.0
    %v924 = vrcp.pop %v923
    %v925 = vmul.f32 1.0, %v924
    %v926 = vtanh.pop %v912
    %v927 = vxor.u32 %v913, 2147483648
    %v928 = vmul.f32 %v927, 1.442695
    %v929 = vpow.pop %v928
    %v930 = vadd.f32 %v929, 1.0
    %v931 = vrcp.pop %v930
    %v932 = vmul.f32 1.0, %v931
    %v933 = vmul.f32 %v925, %v824
    %v934 = vmul.f32 %v919, %v926
    %v935 = vadd.f32 %v933, %v934
    %v936 = vtanh.pop %v935
    %v937 = vmul.f32 %v932, %v936
    %v938 = vpack.c.bf16 %v937, %v937
    %939 = vmatprep.subr.bf16.mxu0 %v432
    %940 = vmatpush1.bf16.msra.mxu0 %v431
    %941 = vmatprep.subr.bf16.mxu0 %v436
    %942 = vmatpush1.bf16.msra.mxu0 %v435
    %943 = vmatprep.subr.bf16.mxu0 %v440
    %944 = vmatpush1.bf16.msra.mxu0 %v439
    %945 = vmatprep.subr.bf16.mxu0 %v444
    %946 = vmatpush1.bf16.msra.mxu0 %v443
    %947 = vmatprep.subr.bf16.mxu0 %v448
    %948 = vmatpush1.bf16.msra.mxu0 %v447
    %949 = vmatprep.subr.bf16.mxu0 %v452
    %950 = vmatpush1.bf16.msra.mxu0 %v451
    %951 = vmatprep.subr.bf16.mxu0 %v456
    %952 = vmatpush1.bf16.msra.mxu0 %v455
    %953 = vmatprep.subr.bf16.mxu0 %v460
    %954 = vmatpush1.bf16.msra.mxu0 %v459
    %955 = vmatprep.subr.bf16.mxu0 0
    %956 = vmatpush1.bf16.msra.mxu0 0
    %957 = vmatprep.subr.bf16.mxu0 0
    %958 = vmatpush1.bf16.msra.mxu0 0
    %959 = vmatprep.subr.bf16.mxu0 0
    %960 = vmatpush1.bf16.msra.mxu0 0
    %961 = vmatprep.subr.bf16.mxu0 0
    %962 = vmatpush1.bf16.msra.mxu0 0
    %963 = vmatprep.subr.bf16.mxu0 0
    %964 = vmatpush1.bf16.msra.mxu0 0
    %965 = vmatprep.subr.bf16.mxu0 0
    %966 = vmatpush1.bf16.msra.mxu0 0
    %967 = vmatprep.subr.bf16.mxu0 0
    %968 = vmatpush1.bf16.msra.mxu0 0
    %969 = vmatprep.subr.bf16.mxu0 0
    %970 = vmatpush1.bf16.msra.mxu0 0
    %971 = vmatprep.mubr.bf16.mxu0 0
    %972 = vmatmul.mubr.bf16.gmra.mrb[0].mxu0 %v938
    %v973 = vpop.f32.mrb[0].mxu0
    %v974 = vadd.f32 0.0, %v973
    %v975 = vpop.f32.mrb[0].mxu0
    %v976 = vadd.f32 0.0, %v975
    %v977 = vpop.f32.mrb[0].mxu0
    %v978 = vpop.f32.mrb[0].mxu0
    %979 = vdwg.mxu0
    %980 = vmatprep.subr.bf16.mxu0 %v434
    %981 = vmatpush1.bf16.msra.mxu0 %v433
    %982 = vmatprep.subr.bf16.mxu0 %v438
    %983 = vmatpush1.bf16.msra.mxu0 %v437
    %984 = vmatprep.subr.bf16.mxu0 %v442
    %985 = vmatpush1.bf16.msra.mxu0 %v441
    %986 = vmatprep.subr.bf16.mxu0 %v446
    %987 = vmatpush1.bf16.msra.mxu0 %v445
    %988 = vmatprep.subr.bf16.mxu0 %v450
    %989 = vmatpush1.bf16.msra.mxu0 %v449
    %990 = vmatprep.subr.bf16.mxu0 %v454
    %991 = vmatpush1.bf16.msra.mxu0 %v453
    %992 = vmatprep.subr.bf16.mxu0 %v458
    %993 = vmatpush1.bf16.msra.mxu0 %v457
    %994 = vmatprep.subr.bf16.mxu0 %v462
    %995 = vmatpush1.bf16.msra.mxu0 %v461
    %996 = vmatprep.subr.bf16.mxu0 0
    %997 = vmatpush1.bf16.msra.mxu0 0
    %998 = vmatprep.subr.bf16.mxu0 0
    %999 = vmatpush1.bf16.msra.mxu0 0
    %1000 = vmatprep.subr.bf16.mxu0 0
    %1001 = vmatpush1.bf16.msra.mxu0 0
    %1002 = vmatprep.subr.bf16.mxu0 0
    %1003 = vmatpush1.bf16.msra.mxu0 0
    %1004 = vmatprep.subr.bf16.mxu0 0
    %1005 = vmatpush1.bf16.msra.mxu0 0
    %1006 = vmatprep.subr.bf16.mxu0 0
    %1007 = vmatpush1.bf16.msra.mxu0 0
    %1008 = vmatprep.subr.bf16.mxu0 0
    %1009 = vmatpush1.bf16.msra.mxu0 0
    %1010 = vmatprep.subr.bf16.mxu0 0
    %1011 = vmatpush1.bf16.msra.mxu0 0
    %1012 = vmatprep.mubr.bf16.mxu0 0
    %1013 = vmatmul.mubr.bf16.gmra.mrb[0].mxu0 %v938
    %v1014 = vpop.f32.mrb[0].mxu0
    %v1015 = vadd.f32 0.0, %v1014
    %v1016 = vpop.f32.mrb[0].mxu0
    %v1017 = vadd.f32 0.0, %v1016
    %v1018 = vpop.f32.mrb[0].mxu0
    %v1019 = vpop.f32.mrb[0].mxu0
    %1020 = vdwg.mxu0
    %v1021 = vadd.f32 %v209, %v974
    %v1022 = vadd.f32 %v211, %v976
    %v1023 = vadd.f32 %v282, %v1015
    %v1024 = vadd.f32 %v284, %v1017
    %v1025 = vxor.u32 %v1021, 2147483648
    %v1026 = vmul.f32 %v1025, 1.442695
    %v1027 = vpow.pop %v1026
    %v1028 = vadd.f32 %v1027, 1.0
    %v1029 = vrcp.pop %v1028
    %v1030 = vmul.f32 1.0, %v1029
    %v1031 = vxor.u32 %v1022, 2147483648
    %v1032 = vmul.f32 %v1031, 1.442695
    %v1033 = vpow.pop %v1032
    %v1034 = vadd.f32 %v1033, 1.0
    %v1035 = vrcp.pop %v1034
    %v1036 = vmul.f32 1.0, %v1035
    %v1037 = vtanh.pop %v1023
    %v1038 = vxor.u32 %v1024, 2147483648
    %v1039 = vmul.f32 %v1038, 1.442695
    %v1040 = vpow.pop %v1039
    %v1041 = vadd.f32 %v1040, 1.0
    %v1042 = vrcp.pop %v1041
    %v1043 = vmul.f32 1.0, %v1042
    %v1044 = vmul.f32 %v1036, %v935
    %v1045 = vmul.f32 %v1030, %v1037
    %v1046 = vadd.f32 %v1044, %v1045
    %v1047 = vtanh.pop %v1046
    %v1048 = vmul.f32 %v1043, %v1047
    %v1049 = vpack.c.bf16 %v1048, %v1048
    %1050 = vmatprep.subr.bf16.mxu0 %v432
    %1051 = vmatpush1.bf16.msra.mxu0 %v431
    %1052 = vmatprep.subr.bf16.mxu0 %v436
    %1053 = vmatpush1.bf16.msra.mxu0 %v435
    %1054 = vmatprep.subr.bf16.mxu0 %v440
    %1055 = vmatpush1.bf16.msra.mxu0 %v439
    %1056 = vmatprep.subr.bf16.mxu0 %v444
    %1057 = vmatpush1.bf16.msra.mxu0 %v443
    %1058 = vmatprep.subr.bf16.mxu0 %v448
    %1059 = vmatpush1.bf16.msra.mxu0 %v447
    %1060 = vmatprep.subr.bf16.mxu0 %v452
    %1061 = vmatpush1.bf16.msra.mxu0 %v451
    %1062 = vmatprep.subr.bf16.mxu0 %v456
    %1063 = vmatpush1.bf16.msra.mxu0 %v455
    %1064 = vmatprep.subr.bf16.mxu0 %v460
    %1065 = vmatpush1.bf16.msra.mxu0 %v459
    %1066 = vmatprep.subr.bf16.mxu0 0
    %1067 = vmatpush1.bf16.msra.mxu0 0
    %1068 = vmatprep.subr.bf16.mxu0 0
    %1069 = vmatpush1.bf16.msra.mxu0 0
    %1070 = vmatprep.subr.bf16.mxu0 0
    %1071 = vmatpush1.bf16.msra.mxu0 0
    %1072 = vmatprep.subr.bf16.mxu0 0
    %1073 = vmatpush1.bf16.msra.mxu0 0
    %1074 = vmatprep.subr.bf16.mxu0 0
    %1075 = vmatpush1.bf16.msra.mxu0 0
    %1076 = vmatprep.subr.bf16.mxu0 0
    %1077 = vmatpush1.bf16.msra.mxu0 0
    %1078 = vmatprep.subr.bf16.mxu0 0
    %1079 = vmatpush1.bf16.msra.mxu0 0
    %1080 = vmatprep.subr.bf16.mxu0 0
    %1081 = vmatpush1.bf16.msra.mxu0 0
    %1082 = vmatprep.mubr.bf16.mxu0 0
    %1083 = vmatmul.mubr.bf16.gmra.mrb[0].mxu0 %v1049
    %v1084 = vpop.f32.mrb[0].mxu0
    %v1085 = vadd.f32 0.0, %v1084
    %v1086 = vpop.f32.mrb[0].mxu0
    %v1087 = vadd.f32 0.0, %v1086
    %v1088 = vpop.f32.mrb[0].mxu0
    %v1089 = vpop.f32.mrb[0].mxu0
    %1090 = vdwg.mxu0
    %1091 = vmatprep.subr.bf16.mxu0 %v434
    %1092 = vmatpush1.bf16.msra.mxu0 %v433
    %1093 = vmatprep.subr.bf16.mxu0 %v438
    %1094 = vmatpush1.bf16.msra.mxu0 %v437
    %1095 = vmatprep.subr.bf16.mxu0 %v442
    %1096 = vmatpush1.bf16.msra.mxu0 %v441
    %1097 = vmatprep.subr.bf16.mxu0 %v446
    %1098 = vmatpush1.bf16.msra.mxu0 %v445
    %1099 = vmatprep.subr.bf16.mxu0 %v450
    %1100 = vmatpush1.bf16.msra.mxu0 %v449
    %1101 = vmatprep.subr.bf16.mxu0 %v454
    %1102 = vmatpush1.bf16.msra.mxu0 %v453
    %1103 = vmatprep.subr.bf16.mxu0 %v458
    %1104 = vmatpush1.bf16.msra.mxu0 %v457
    %1105 = vmatprep.subr.bf16.mxu0 %v462
    %1106 = vmatpush1.bf16.msra.mxu0 %v461
    %1107 = vmatprep.subr.bf16.mxu0 0
    %1108 = vmatpush1.bf16.msra.mxu0 0
    %1109 = vmatprep.subr.bf16.mxu0 0
    %1110 = vmatpush1.bf16.msra.mxu0 0
    %1111 = vmatprep.subr.bf16.mxu0 0
    %1112 = vmatpush1.bf16.msra.mxu0 0
    %1113 = vmatprep.subr.bf16.mxu0 0
    %1114 = vmatpush1.bf16.msra.mxu0 0
    %1115 = vmatprep.subr.bf16.mxu0 0
    %1116 = vmatpush1.bf16.msra.mxu0 0
    %1117 = vmatprep.subr.bf16.mxu0 0
    %1118 = vmatpush1.bf16.msra.mxu0 0
    %1119 = vmatprep.subr.bf16.mxu0 0
    %1120 = vmatpush1.bf16.msra.mxu0 0
    %1121 = vmatprep.subr.bf16.mxu0 0
    %1122 = vmatpush1.bf16.msra.mxu0 0
    %1123 = vmatprep.mubr.bf16.mxu0 0
    %1124 = vmatmul.mubr.bf16.gmra.mrb[0].mxu0 %v1049
    %v1125 = vpop.f32.mrb[0].mxu0
    %v1126 = vadd.f32 0.0, %v1125
    %v1127 = vpop.f32.mrb[0].mxu0
    %v1128 = vadd.f32 0.0, %v1127
    %v1129 = vpop.f32.mrb[0].mxu0
    %v1130 = vpop.f32.mrb[0].mxu0
    %1131 = vdwg.mxu0
    %v1132 = vadd.f32 %v213, %v1085
    %v1133 = vadd.f32 %v215, %v1087
    %v1134 = vadd.f32 %v286, %v1126
    %v1135 = vadd.f32 %v288, %v1128
    %v1136 = vxor.u32 %v1132, 2147483648
    %v1137 = vmul.f32 %v1136, 1.442695
    %v1138 = vpow.pop %v1137
    %v1139 = vadd.f32 %v1138, 1.0
    %v1140 = vrcp.pop %v1139
    %v1141 = vmul.f32 1.0, %v1140
    %v1142 = vxor.u32 %v1133, 2147483648
    %v1143 = vmul.f32 %v1142, 1.442695
    %v1144 = vpow.pop %v1143
    %v1145 = vadd.f32 %v1144, 1.0
    %v1146 = vrcp.pop %v1145
    %v1147 = vmul.f32 1.0, %v1146
    %v1148 = vtanh.pop %v1134
    %v1149 = vxor.u32 %v1135, 2147483648
    %v1150 = vmul.f32 %v1149, 1.442695
    %v1151 = vpow.pop %v1150
    %v1152 = vadd.f32 %v1151, 1.0
    %v1153 = vrcp.pop %v1152
    %v1154 = vmul.f32 1.0, %v1153
    %v1155 = vmul.f32 %v1147, %v1046
    %v1156 = vmul.f32 %v1141, %v1148
    %v1157 = vadd.f32 %v1155, %v1156
    %v1158 = vtanh.pop %v1157
    %v1159 = vmul.f32 %v1154, %v1158
    %v1160 = vpack.c.bf16 %v1159, %v1159
    %1161 = vmatprep.subr.bf16.mxu0 %v432
    %1162 = vmatpush1.bf16.msra.mxu0 %v431
    %1163 = vmatprep.subr.bf16.mxu0 %v436
    %1164 = vmatpush1.bf16.msra.mxu0 %v435
    %1165 = vmatprep.subr.bf16.mxu0 %v440
    %1166 = vmatpush1.bf16.msra.mxu0 %v439
    %1167 = vmatprep.subr.bf16.mxu0 %v444
    %1168 = vmatpush1.bf16.msra.mxu0 %v443
    %1169 = vmatprep.subr.bf16.mxu0 %v448
    %1170 = vmatpush1.bf16.msra.mxu0 %v447
    %1171 = vmatprep.subr.bf16.mxu0 %v452
    %1172 = vmatpush1.bf16.msra.mxu0 %v451
    %1173 = vmatprep.subr.bf16.mxu0 %v456
    %1174 = vmatpush1.bf16.msra.mxu0 %v455
    %1175 = vmatprep.subr.bf16.mxu0 %v460
    %1176 = vmatpush1.bf16.msra.mxu0 %v459
    %1177 = vmatprep.subr.bf16.mxu0 0
    %1178 = vmatpush1.bf16.msra.mxu0 0
    %1179 = vmatprep.subr.bf16.mxu0 0
    %1180 = vmatpush1.bf16.msra.mxu0 0
    %1181 = vmatprep.subr.bf16.mxu0 0
    %1182 = vmatpush1.bf16.msra.mxu0 0
    %1183 = vmatprep.subr.bf16.mxu0 0
    %1184 = vmatpush1.bf16.msra.mxu0 0
    %1185 = vmatprep.subr.bf16.mxu0 0
    %1186 = vmatpush1.bf16.msra.mxu0 0
    %1187 = vmatprep.subr.bf16.mxu0 0
    %1188 = vmatpush1.bf16.msra.mxu0 0
    %1189 = vmatprep.subr.bf16.mxu0 0
    %1190 = vmatpush1.bf16.msra.mxu0 0
    %1191 = vmatprep.subr.bf16.mxu0 0
    %1192 = vmatpush1.bf16.msra.mxu0 0
    %1193 = vmatprep.mubr.bf16.mxu0 0
    %1194 = vmatmul.mubr.bf16.gmra.mrb[0].mxu0 %v1160
    %v1195 = vpop.f32.mrb[0].mxu0
    %v1196 = vadd.f32 0.0, %v1195
    %v1197 = vpop.f32.mrb[0].mxu0
    %v1198 = vadd.f32 0.0, %v1197
    %v1199 = vpop.f32.mrb[0].mxu0
    %v1200 = vpop.f32.mrb[0].mxu0
    %1201 = vdwg.mxu0
    %1202 = vmatprep.subr.bf16.mxu0 %v434
    %1203 = vmatpush1.bf16.msra.mxu0 %v433
    %1204 = vmatprep.subr.bf16.mxu0 %v438
    %1205 = vmatpush1.bf16.msra.mxu0 %v437
    %1206 = vmatprep.subr.bf16.mxu0 %v442
    %1207 = vmatpush1.bf16.msra.mxu0 %v441
    %1208 = vmatprep.subr.bf16.mxu0 %v446
    %1209 = vmatpush1.bf16.msra.mxu0 %v445
    %1210 = vmatprep.subr.bf16.mxu0 %v450
    %1211 = vmatpush1.bf16.msra.mxu0 %v449
    %1212 = vmatprep.subr.bf16.mxu0 %v454
    %1213 = vmatpush1.bf16.msra.mxu0 %v453
    %1214 = vmatprep.subr.bf16.mxu0 %v458
    %1215 = vmatpush1.bf16.msra.mxu0 %v457
    %1216 = vmatprep.subr.bf16.mxu0 %v462
    %1217 = vmatpush1.bf16.msra.mxu0 %v461
    %1218 = vmatprep.subr.bf16.mxu0 0
    %1219 = vmatpush1.bf16.msra.mxu0 0
    %1220 = vmatprep.subr.bf16.mxu0 0
    %1221 = vmatpush1.bf16.msra.mxu0 0
    %1222 = vmatprep.subr.bf16.mxu0 0
    %1223 = vmatpush1.bf16.msra.mxu0 0
    %1224 = vmatprep.subr.bf16.mxu0 0
    %1225 = vmatpush1.bf16.msra.mxu0 0
    %1226 = vmatprep.subr.bf16.mxu0 0
    %1227 = vmatpush1.bf16.msra.mxu0 0
    %1228 = vmatprep.subr.bf16.mxu0 0
    %1229 = vmatpush1.bf16.msra.mxu0 0
    %1230 = vmatprep.subr.bf16.mxu0 0
    %1231 = vmatpush1.bf16.msra.mxu0 0
    %1232 = vmatprep.subr.bf16.mxu0 0
    %1233 = vmatpush1.bf16.msra.mxu0 0
    %1234 = vmatprep.mubr.bf16.mxu0 0
    %1235 = vmatmul.mubr.bf16.gmra.mrb[0].mxu0 %v1160
    %v1236 = vpop.f32.mrb[0].mxu0
    %v1237 = vadd.f32 0.0, %v1236
    %v1238 = vpop.f32.mrb[0].mxu0
    %v1239 = vadd.f32 0.0, %v1238
    %v1240 = vpop.f32.mrb[0].mxu0
    %v1241 = vpop.f32.mrb[0].mxu0
    %1242 = vdwg.mxu0
    %v1243 = vadd.f32 %v219, %v1196
    %v1244 = vadd.f32 %v221, %v1198
    %v1245 = vadd.f32 %v292, %v1237
    %v1246 = vadd.f32 %v294, %v1239
    %v1247 = vxor.u32 %v1243, 2147483648
    %v1248 = vmul.f32 %v1247, 1.442695
    %v1249 = vpow.pop %v1248
    %v1250 = vadd.f32 %v1249, 1.0
    %v1251 = vrcp.pop %v1250
    %v1252 = vmul.f32 1.0, %v1251
    %v1253 = vxor.u32 %v1244, 2147483648
    %v1254 = vmul.f32 %v1253, 1.442695
    %v1255 = vpow.pop %v1254
    %v1256 = vadd.f32 %v1255, 1.0
    %v1257 = vrcp.pop %v1256
    %v1258 = vmul.f32 1.0, %v1257
    %v1259 = vtanh.pop %v1245
    %v1260 = vxor.u32 %v1246, 2147483648
    %v1261 = vmul.f32 %v1260, 1.442695
    %v1262 = vpow.pop %v1261
    %v1263 = vadd.f32 %v1262, 1.0
    %v1264 = vrcp.pop %v1263
    %v1265 = vmul.f32 1.0, %v1264
    %v1266 = vmul.f32 %v1258, %v1157
    %v1267 = vmul.f32 %v1252, %v1259
    %v1268 = vadd.f32 %v1266, %v1267
    %v1269 = vtanh.pop %v1268
    %v1270 = vmul.f32 %v1265, %v1269
    %v1271 = vpack.c.bf16 %v1270, %v1270
    %1272 = vmatprep.subr.bf16.mxu0 %v432
    %1273 = vmatpush1.bf16.msra.mxu0 %v431
    %1274 = vmatprep.subr.bf16.mxu0 %v436
    %1275 = vmatpush1.bf16.msra.mxu0 %v435
    %1276 = vmatprep.subr.bf16.mxu0 %v440
    %1277 = vmatpush1.bf16.msra.mxu0 %v439
    %1278 = vmatprep.subr.bf16.mxu0 %v444
    %1279 = vmatpush1.bf16.msra.mxu0 %v443
    %1280 = vmatprep.subr.bf16.mxu0 %v448
    %1281 = vmatpush1.bf16.msra.mxu0 %v447
    %1282 = vmatprep.subr.bf16.mxu0 %v452
    %1283 = vmatpush1.bf16.msra.mxu0 %v451
    %1284 = vmatprep.subr.bf16.mxu0 %v456
    %1285 = vmatpush1.bf16.msra.mxu0 %v455
    %1286 = vmatprep.subr.bf16.mxu0 %v460
    %1287 = vmatpush1.bf16.msra.mxu0 %v459
    %1288 = vmatprep.subr.bf16.mxu0 0
    %1289 = vmatpush1.bf16.msra.mxu0 0
    %1290 = vmatprep.subr.bf16.mxu0 0
    %1291 = vmatpush1.bf16.msra.mxu0 0
    %1292 = vmatprep.subr.bf16.mxu0 0
    %1293 = vmatpush1.bf16.msra.mxu0 0
    %1294 = vmatprep.subr.bf16.mxu0 0
    %1295 = vmatpush1.bf16.msra.mxu0 0
    %1296 = vmatprep.subr.bf16.mxu0 0
    %1297 = vmatpush1.bf16.msra.mxu0 0
    %1298 = vmatprep.subr.bf16.mxu0 0
    %1299 = vmatpush1.bf16.msra.mxu0 0
    %1300 = vmatprep.subr.bf16.mxu0 0
    %1301 = vmatpush1.bf16.msra.mxu0 0
    %1302 = vmatprep.subr.bf16.mxu0 0
    %1303 = vmatpush1.bf16.msra.mxu0 0
    %1304 = vmatprep.mubr.bf16.mxu0 0
    %1305 = vmatmul.mubr.bf16.gmra.mrb[0].mxu0 %v1271
    %v1306 = vpop.f32.mrb[0].mxu0
    %v1307 = vadd.f32 0.0, %v1306
    %v1308 = vpop.f32.mrb[0].mxu0
    %v1309 = vadd.f32 0.0, %v1308
    %v1310 = vpop.f32.mrb[0].mxu0
    %v1311 = vpop.f32.mrb[0].mxu0
    %1312 = vdwg.mxu0
    %1313 = vmatprep.subr.bf16.mxu0 %v434
    %1314 = vmatpush1.bf16.msra.mxu0 %v433
    %1315 = vmatprep.subr.bf16.mxu0 %v438
    %1316 = vmatpush1.bf16.msra.mxu0 %v437
    %1317 = vmatprep.subr.bf16.mxu0 %v442
    %1318 = vmatpush1.bf16.msra.mxu0 %v441
    %1319 = vmatprep.subr.bf16.mxu0 %v446
    %1320 = vmatpush1.bf16.msra.mxu0 %v445
    %1321 = vmatprep.subr.bf16.mxu0 %v450
    %1322 = vmatpush1.bf16.msra.mxu0 %v449
    %1323 = vmatprep.subr.bf16.mxu0 %v454
    %1324 = vmatpush1.bf16.msra.mxu0 %v453
    %1325 = vmatprep.subr.bf16.mxu0 %v458
    %1326 = vmatpush1.bf16.msra.mxu0 %v457
    %1327 = vmatprep.subr.bf16.mxu0 %v462
    %1328 = vmatpush1.bf16.msra.mxu0 %v461
    %1329 = vmatprep.subr.bf16.mxu0 0
    %1330 = vmatpush1.bf16.msra.mxu0 0
    %1331 = vmatprep.subr.bf16.mxu0 0
    %1332 = vmatpush1.bf16.msra.mxu0 0
    %1333 = vmatprep.subr.bf16.mxu0 0
    %1334 = vmatpush1.bf16.msra.mxu0 0
    %1335 = vmatprep.subr.bf16.mxu0 0
    %1336 = vmatpush1.bf16.msra.mxu0 0
    %1337 = vmatprep.subr.bf16.mxu0 0
    %1338 = vmatpush1.bf16.msra.mxu0 0
    %1339 = vmatprep.subr.bf16.mxu0 0
    %1340 = vmatpush1.bf16.msra.mxu0 0
    %1341 = vmatprep.subr.bf16.mxu0 0
    %1342 = vmatpush1.bf16.msra.mxu0 0
    %1343 = vmatprep.subr.bf16.mxu0 0
    %1344 = vmatpush1.bf16.msra.mxu0 0
    %1345 = vmatprep.mubr.bf16.mxu0 0
    %1346 = vmatmul.mubr.bf16.gmra.mrb[0].mxu0 %v1271
    %v1347 = vpop.f32.mrb[0].mxu0
    %v1348 = vadd.f32 0.0, %v1347
    %v1349 = vpop.f32.mrb[0].mxu0
    %v1350 = vadd.f32 0.0, %v1349
    %v1351 = vpop.f32.mrb[0].mxu0
    %v1352 = vpop.f32.mrb[0].mxu0
    %1353 = vdwg.mxu0
    %v1354 = vadd.f32 %v223, %v1307
    %v1355 = vadd.f32 %v225, %v1309
    %v1356 = vadd.f32 %v296, %v1348
    %v1357 = vadd.f32 %v298, %v1350
    %v1358 = vxor.u32 %v1354, 2147483648
    %v1359 = vmul.f32 %v1358, 1.442695
    %v1360 = vpow.pop %v1359
    %v1361 = vadd.f32 %v1360, 1.0
    %v1362 = vrcp.pop %v1361
    %v1363 = vmul.f32 1.0, %v1362
    %v1364 = vxor.u32 %v1355, 2147483648
    %v1365 = vmul.f32 %v1364, 1.442695
    %v1366 = vpow.pop %v1365
    %v1367 = vadd.f32 %v1366, 1.0
    %v1368 = vrcp.pop %v1367
    %v1369 = vmul.f32 1.0, %v1368
    %v1370 = vtanh.pop %v1356
    %v1371 = vxor.u32 %v1357, 2147483648
    %v1372 = vmul.f32 %v1371, 1.442695
    %v1373 = vpow.pop %v1372
    %v1374 = vadd.f32 %v1373, 1.0
    %v1375 = vrcp.pop %v1374
    %v1376 = vmul.f32 1.0, %v1375
    %v1377 = vmul.f32 %v1369, %v1268
    %v1378 = vmul.f32 %v1363, %v1370
    %v1379 = vadd.f32 %v1377, %v1378
    %v1380 = vtanh.pop %v1379
    %v1381 = vmul.f32 %v1376, %v1380
    %1382 = vst [vmem:[#allocation2] sm:$0xff] %v1381
    %1383 = vst [vmem:[#allocation3] sm:$0xff] %v1379
    // Predicated region
    $region38: #{tpu_custom_call.1} parent=1 // pred_check
      %p1384 = pneg %p53
    $region39: #{tpu_custom_call.1} parent=1 // pred_check_branch
      %1386 = sbr.rel (%p1384) target = $region41
    $region40: #{tpu_custom_call.1} parent=1 // pred_region
      %v1387 = vpack.c.bf16 %v1381, %v1381
      %v1388 = vld [vmem:[#allocation7] sm:$0xf]
      %v1389 = vld [vmem:[#allocation7 + $0x4] sm:$0xf]
      %v1390 = vld [vmem:[#allocation7 + $0x8] sm:$0xf]
      %v1391 = vld [vmem:[#allocation7 + $0xc] sm:$0xf]
      %v1392 = vld [vmem:[#allocation7 + $0x10] sm:$0xf]
      %v1393 = vld [vmem:[#allocation7 + $0x14] sm:$0xf]
      %v1394 = vld [vmem:[#allocation7 + $0x18] sm:$0xf]
      %v1395 = vld [vmem:[#allocation7 + $0x1c] sm:$0xf]
      %v1396 = vld [vmem:[#allocation7 + $0x20] sm:$0xf]
      %v1397 = vld [vmem:[#allocation7 + $0x24] sm:$0xf]
      %v1398 = vld [vmem:[#allocation7 + $0x28] sm:$0xf]
      %v1399 = vld [vmem:[#allocation7 + $0x2c] sm:$0xf]
      %v1400 = vld [vmem:[#allocation7 + $0x30] sm:$0xf]
      %v1401 = vld [vmem:[#allocation7 + $0x34] sm:$0xf]
      %v1402 = vld [vmem:[#allocation7 + $0x38] sm:$0xf]
      %v1403 = vld [vmem:[#allocation7 + $0x3c] sm:$0xf]
      %v1404 = vld [vmem:[%s5] sm:$0x1]
      %v1406 = vlaneseq
      %v1407 = vshrl.u32 %v1406, 7
      %v1408 = vsub.s32 0, %v1407
      %v1409 = vrot.slane %v1404, %v1408
      %v1427 = vunpack.c.l.b16 %v1388
      %v1428 = vunpack.c.l.b16 %v1389
      %v1429 = vunpack.c.l.b16 %v1390
      %v1430 = vunpack.c.l.b16 %v1391
      %v1431 = vunpack.c.l.b16 %v1392
      %v1432 = vunpack.c.l.b16 %v1393
      %v1433 = vunpack.c.l.b16 %v1394
      %v1434 = vunpack.c.l.b16 %v1395
      %v1435 = vunpack.c.l.b16 %v1396
      %v1436 = vunpack.c.l.b16 %v1397
      %v1437 = vunpack.c.l.b16 %v1398
      %v1438 = vunpack.c.l.b16 %v1399
      %v1439 = vunpack.c.l.b16 %v1400
      %v1440 = vunpack.c.l.b16 %v1401
      %v1441 = vunpack.c.l.b16 %v1402
      %v1442 = vunpack.c.l.b16 %v1403
      %v1443 = vpack.c.b16 %v1428, %v1427
      %v1444 = vpack.c.b16 %v1430, %v1429
      %v1445 = vpack.c.b16 %v1432, %v1431
      %v1446 = vpack.c.b16 %v1434, %v1433
      %v1447 = vpack.c.b16 %v1436, %v1435
      %v1448 = vpack.c.b16 %v1438, %v1437
      %v1449 = vpack.c.b16 %v1440, %v1439
      %v1450 = vpack.c.b16 %v1442, %v1441
      %1459 = vmatprep.subr.bf16.mxu0 0
      %1460 = vmatpush1.bf16.msra.mxu0 %v1443
      %1461 = vmatprep.subr.bf16.mxu0 0
      %1462 = vmatpush1.bf16.msra.mxu0 %v1444
      %1463 = vmatprep.subr.bf16.mxu0 0
      %1464 = vmatpush1.bf16.msra.mxu0 %v1445
      %1465 = vmatprep.subr.bf16.mxu0 0
      %1466 = vmatpush1.bf16.msra.mxu0 %v1446
      %1467 = vmatprep.subr.bf16.mxu0 0
      %1468 = vmatpush1.bf16.msra.mxu0 %v1447
      %1469 = vmatprep.subr.bf16.mxu0 0
      %1470 = vmatpush1.bf16.msra.mxu0 %v1448
      %1471 = vmatprep.subr.bf16.mxu0 0
      %1472 = vmatpush1.bf16.msra.mxu0 %v1449
      %1473 = vmatprep.subr.bf16.mxu0 0
      %1474 = vmatpush1.bf16.msra.mxu0 %v1450
      %1475 = vmatprep.subr.bf16.mxu0 0
      %1476 = vmatpush1.bf16.msra.mxu0 0
      %1477 = vmatprep.subr.bf16.mxu0 0
      %1478 = vmatpush1.bf16.msra.mxu0 0
      %1479 = vmatprep.subr.bf16.mxu0 0
      %1480 = vmatpush1.bf16.msra.mxu0 0
      %1481 = vmatprep.subr.bf16.mxu0 0
      %1482 = vmatpush1.bf16.msra.mxu0 0
      %1483 = vmatprep.subr.bf16.mxu0 0
      %1484 = vmatpush1.bf16.msra.mxu0 0
      %1485 = vmatprep.subr.bf16.mxu0 0
      %1486 = vmatpush1.bf16.msra.mxu0 0
      %1487 = vmatprep.subr.bf16.mxu0 0
      %1488 = vmatpush1.bf16.msra.mxu0 0
      %1489 = vmatprep.subr.bf16.mxu0 0
      %1490 = vmatpush1.bf16.msra.mxu0 0
      %1491 = vmatprep.mubr.bf16.mxu0 0
      %1492 = vmatmul.mubr.bf16.gmra.mrb[0].mxu0 %v1387
      %v1493 = vpop.f32.mrb[0].mxu0
      %v1494 = vadd.f32 %v1409, %v1493
      %v1495 = vpop.f32.mrb[0].mxu0
      %v1496 = vpop.f32.mrb[0].mxu0
      %v1497 = vpop.f32.mrb[0].mxu0
      %1498 = vdwg.mxu0
      %1499 = vst [vmem:[#allocation9] sm:$0xff] %v1494
    $region41: #{tpu_custom_call.1} parent=1 // pred_fallthru
      _
    // Predicated region
    $region42: #{tpu_custom_call.1} parent=1 // pred_check
      _
    $region43: #{tpu_custom_call.1} parent=1 // pred_check_branch
      %1501 = sbr.rel (0) target = $region45
    $region44: #{tpu_custom_call.1} parent=1 // pred_region
      %s1503 = ssub.s32 128, 128
      %1504 = vsyncadd [#allocation6], %s1503
      %s1506 = sshll.u32 [#allocation9], 4
      %s1507 = int_to_ptr.vmem [resolvable:$true] %s1506
      %1509 = dma.vmem_to_hbm [thread:$0]  %s1507, 128, %s6, [#allocation6]
    $region45: #{tpu_custom_call.1} parent=1 // pred_fallthru
      _
    // Predicated region
    $region46: #{tpu_custom_call.1} parent=1 // pred_check
      _
    $region47: #{tpu_custom_call.1} parent=1 // pred_check_branch
      %1511 = sbr.rel (0) target = $region49
    $region48: #{tpu_custom_call.1} parent=1 // pred_region
      %1512 = dma.done [#allocation6], 128
    $region49: #{tpu_custom_call.1} parent=1 // pred_fallthru
      _
    %1513 = vsyncpa [#allocation5], 1
    %1514 = vsyncpa [#allocation8], 1
    %1515 = vsyncpa [#allocation6], 1

</llo_original>
